<compile_context>
chip_gen: v7x
topology: tpu7x:2x2x1
jax: 0.10.0
libtpu: 0.0.40
codegen_flags: <defaults>
</compile_context>

<pallas_src>
import functools

import jax
import jax.numpy as jnp
from jax.experimental import pallas as pl
from jax.experimental.pallas import tpu as pltpu


_LANE = 128


def _round_up(v, m):
    return ((v + m - 1) // m) * m


def _sublane(dtype):
    # Packed (16,128) native tile for 16-bit operands, (8,128) for 32-bit.
    return 16 if jnp.dtype(dtype).itemsize == 2 else 8


def _pad2d(a, rows, cols):
    return jnp.pad(a, ((0, rows - a.shape[0]), (0, cols - a.shape[1])))


def _vmem_budgets():
    # Generation-aware limits: ~52 MiB on v7x (64 MiB physical), ~105 MiB on
    # v5e/v6e (128 MiB physical).  Headroom left for Mosaic internal scratch,
    # semaphores and the compiler's own buffers.
    try:
        cap = int(pltpu.get_tpu_info().vmem_capacity_bytes)
    except Exception:
        cap = 64 * 1024 * 1024          # conservative (v7x-sized) fallback
    limit = int(cap * 0.82)
    fused_budget = int(limit * 0.85)
    return limit, fused_budget


_VMEM_LIMIT_BYTES, _FUSED_VMEM_BUDGET = _vmem_budgets()


def _apply_activation(y, activation):
    if activation == "relu":
        return jnp.maximum(y, 0.0)
    if activation == "tanh":
        return jnp.tanh(y)              # EUP slot, effectively free per tile
    return y


# ---------------------------------------------------------------------------
# One-time weight preparation (hoisted out of the forward pass).
# ---------------------------------------------------------------------------
def prepare_mlp_params(params, compute_dtype=jnp.float32):
    """Transpose each weight to (in, out), zero-pad feature dims to lane (128)
    multiples and cast to the MXU operand dtype.  Biases stay float32
    (epilogue precision).  Padding is mathematically inert (zero rows/cols,
    relu(0)=tanh(0)=0)."""
    dims = [params[0][0].shape[1]] + [w.shape[0] for (w, _) in params]
    pdims = [_round_up(d, _LANE) for d in dims]
    weights = []
    for l, (w, b) in enumerate(params):
        kp, np_ = pdims[l], pdims[l + 1]
        weights.append((_pad2d(w.T, kp, np_).astype(compute_dtype),
                        _pad2d(b, 1, np_).astype(jnp.float32)))
    return {"weights": weights, "dims": dims, "pdims": pdims,
            "compute_dtype": jnp.dtype(compute_dtype)}


# ---------------------------------------------------------------------------
# Path 1: fused whole-MLP kernel (weights resident in VMEM, grid over batch).
# ---------------------------------------------------------------------------
def _fused_mlp_kernel(*refs, activation, n_layers):
    # refs = (x_ref, w0, b0, w1, b1, ..., o_ref); each w_l is (K_pad, N_pad).
    x_ref, o_ref = refs[0], refs[-1]
    h = x_ref[...]
    for l in range(n_layers):
        w = refs[1 + 2 * l][...]
        b = refs[2 + 2 * l][...]
        y = jax.lax.dot_general(
            h.astype(w.dtype), w,
            dimension_numbers=(((1,), (0,)), ((), ())),
            preferred_element_type=jnp.float32)
        y = y + b.astype(jnp.float32)
        if l < n_layers - 1:
            y = _apply_activation(y, activation)     # f32 epilogue
        h = y
    o_ref[...] = h.astype(o_ref.dtype)
    # TODO(synk): for deep, uniform-width MLPs, stack hidden weights into one
    # (L, K, N) array and iterate with lax.fori_loop to bound vreg live ranges.


def fused_mlp_pallas(x, prepared, activation="relu", block_batch=512):
    out_dtype = x.dtype
    batch = x.shape[0]
    dims, pdims = prepared["dims"], prepared["pdims"]
    weights = prepared["weights"]
    compute_dtype = prepared["compute_dtype"]
    n_layers = len(weights)

    sub = _sublane(compute_dtype)
    m_sub = _round_up(batch, sub)
    # >=2 row blocks whenever the batch allows (v7x dual TensorCore), with the
    # block count picked so batch-padding waste stays small.
    g = max(pl.cdiv(m_sub, block_batch), 2 if m_sub >= 2 * sub else 1)
    tm = _round_up(pl.cdiv(m_sub, g), sub)
    b_pad = tm * g

    x_p = _pad2d(x, b_pad, pdims[0]).astype(compute_dtype)
    flat_wb = []
    for (w_p, b_p) in weights:
        flat_wb += [w_p, b_p]

    def build_in_specs(single_buffer_weights):
        specs = [pl.BlockSpec((tm, pdims[0]), lambda i: (i, 0))]
        for (w_p, b_p) in weights:
            if single_buffer_weights:
                # Grid-invariant inputs: single-buffer them so resident weight
                # VMEM is not doubled by the default pipelining.
                specs.append(pl.BlockSpec(w_p.shape, lambda i: (0, 0),
                                          pipeline_mode=pl.Buffered(1)))
                specs.append(pl.BlockSpec(b_p.shape, lambda i: (0, 0),
                                          pipeline_mode=pl.Buffered(1)))
            else:
                specs.append(pl.BlockSpec(w_p.shape, lambda i: (0, 0)))
                specs.append(pl.BlockSpec(b_p.shape, lambda i: (0, 0)))
        return specs

    def run(single_buffer_weights):
        return pl.pallas_call(
            functools.partial(_fused_mlp_kernel, activation=activation,
                              n_layers=n_layers),
            out_shape=jax.ShapeDtypeStruct((b_pad, pdims[-1]), out_dtype),
            grid_spec=pltpu.PrefetchScalarGridSpec(
                num_scalar_prefetch=0,
                grid=(b_pad // tm,),
                in_specs=build_in_specs(single_buffer_weights),
                out_specs=pl.BlockSpec((tm, pdims[-1]), lambda i: (i, 0))),
            compiler_params=pltpu.CompilerParams(
                dimension_semantics=("parallel",),
                vmem_limit_bytes=_VMEM_LIMIT_BYTES),
        )(x_p, *flat_wb)

    try:
        out = run(True)
    except Exception:
        # pipeline_mode / Buffered(1) not supported on this jax version:
        # fall back to default double-buffering (correctness identical).
        out = run(False)
    return out[:batch, :dims[-1]]


# ---------------------------------------------------------------------------
# Path 2: tiled single-layer kernel (for layers too large to keep resident).
# ---------------------------------------------------------------------------
def _linear_tiled_kernel(x_ref, w_ref, b_ref, o_ref, acc_ref, *, activation):
    k = pl.program_id(2)

    @pl.when(k == 0)
    def _():
        acc_ref[...] = jnp.zeros_like(acc_ref)

    acc_ref[...] += jax.lax.dot_general(
        x_ref[...], w_ref[...],
        dimension_numbers=(((1,), (0,)), ((), ())),
        preferred_element_type=jnp.float32)

    @pl.when(k == pl.num_programs(2) - 1)
    def _():
        y = acc_ref[...] + b_ref[...].astype(jnp.float32)
        y = _apply_activation(y, activation)
        o_ref[...] = y.astype(o_ref.dtype)


def _pick_tile(dim, t_max, align):
    """Largest aligned tile <= t_max that keeps extra padding of `dim` small."""
    if dim <= t_max:
        return dim, dim
    g = pl.cdiv(dim, t_max)
    t = _round_up(pl.cdiv(dim, g), align)
    return t, t * g


def linear_tiled_pallas(x, w_p, b_p, out_f, activation=None, out_dtype=None,
                        tm=512, tn=512, tk=512):
    """y = act(x @ w_p + b_p)[:, :out_f]; w_p is pre-transposed/padded (K, N)."""
    out_dtype = x.dtype if out_dtype is None else out_dtype
    cd = w_p.dtype
    batch = x.shape[0]
    k_w, n_w = w_p.shape
    sub = _sublane(cd)

    # Row tiling: sublane-aligned (16 for bf16), low batch-padding waste.
    m_sub = _round_up(batch, sub)
    gm = pl.cdiv(m_sub, tm)
    tm_eff = _round_up(pl.cdiv(m_sub, gm), sub)

    tk_eff, k_pad = _pick_tile(k_w, tk, _LANE)
    tn_eff, n_pad = _pick_tile(n_w, tn, _LANE)

    # Cap the double-buffered working set (+ f32 accumulator scratch) at ~2/3
    # of the VMEM limit so big tiles never overshoot v7x's 64 MiB.
    it = jnp.dtype(cd).itemsize
    ot = jnp.dtype(out_dtype).itemsize

    def footprint(tm_):
        return (2 * (tm_ * tk_eff + tk_eff * tn_eff) * it
                + 2 * tm_ * tn_eff * ot + tm_ * tn_eff * 4 + 2 * tn_eff * 4)

    while footprint(tm_eff) > (2 * _VMEM_LIMIT_BYTES) // 3 and tm_eff > sub:
        tm_eff = max(sub, _round_up(tm_eff // 2, sub))
    gm = pl.cdiv(m_sub, tm_eff)
    m_pad = tm_eff * gm

    x_p = _pad2d(x, m_pad, k_pad).astype(cd)
    w_pp = _pad2d(w_p, k_pad, n_pad)         # no-op for typical (2^k) widths
    b_pp = _pad2d(b_p, 1, n_pad)

    # TODO(synk): on v5e, try pipeline_mode=pl.Buffered(3) on the weight spec
    # for short-K / large-N layers where the weight DMA is exposed.
    out = pl.pallas_call(
        functools.partial(_linear_tiled_kernel, activation=activation),
        out_shape=jax.ShapeDtypeStruct((m_pad, n_pad), out_dtype),
        grid_spec=pltpu.PrefetchScalarGridSpec(
            num_scalar_prefetch=0,
            grid=(m_pad // tm_eff, n_pad // tn_eff, k_pad // tk_eff),
            in_specs=[pl.BlockSpec((tm_eff, tk_eff), lambda i, j, k: (i, k)),
                      pl.BlockSpec((tk_eff, tn_eff), lambda i, j, k: (k, j)),
                      pl.BlockSpec((1, tn_eff), lambda i, j, k: (0, j))],
            out_specs=pl.BlockSpec((tm_eff, tn_eff), lambda i, j, k: (i, j)),
            scratch_shapes=[pltpu.VMEM((tm_eff, tn_eff), jnp.float32)]),
        compiler_params=pltpu.CompilerParams(
            dimension_semantics=("parallel", "parallel", "arbitrary"),
            vmem_limit_bytes=_VMEM_LIMIT_BYTES),
    )(x_p, w_pp, b_pp)
    return out[:batch, :out_f]


# ---------------------------------------------------------------------------
# Forward pass (matches MLP.forward: activation after every layer but last).
# ---------------------------------------------------------------------------
def _fused_fits_vmem(dims, compute_dtype, batch_tile,
                     budget_bytes=_FUSED_VMEM_BUDGET):
    pdims = [_round_up(d, _LANE) for d in dims]
    ws = jnp.dtype(compute_dtype).itemsize
    weight_bytes = sum(pdims[l] * pdims[l + 1]
                       for l in range(len(pdims) - 1)) * ws  # single-buffered
    bias_bytes = sum(p * 4 for p in pdims[1:])
    # double-buffered x/out tiles + ~3 live f32 intermediates of widest layer
    act_bytes = (2 * batch_tile * (pdims[0] + pdims[-1]) * max(ws, 4)
                 + 3 * batch_tile * max(pdims) * 4)
    return weight_bytes + bias_bytes + act_bytes < budget_bytes


def make_mlp_forward(params, activation="relu", compute_dtype=None,
                     force_tiled=False, block_batch=512, tm=512, tn=512, tk=512):
    """Prepare weights once (transpose/pad/cast hoisted out of the hot path)
    and return a forward(x) closure matching MLP.forward.
    compute_dtype=None -> f32 for the fused path, bf16 MXU operands for the
    tiled path (f32 accumulation/epilogue in both cases)."""
    dims = [params[0][0].shape[1]] + [w.shape[0] for (w, _) in params]
    fused_dtype = jnp.float32 if compute_dtype is None else compute_dtype
    tiled_dtype = jnp.bfloat16 if compute_dtype is None else compute_dtype

    use_fused = (not force_tiled) and _fused_fits_vmem(dims, fused_dtype,
                                                       min(block_batch, 512))
    prepared = prepare_mlp_params(params,
                                  fused_dtype if use_fused else tiled_dtype)

    def tiled_forward(x):
        final_dtype = x.dtype
        weights = prepared["weights"]
        h = x
        for l, (w_p, b_p) in enumerate(weights):
            last = l == len(weights) - 1
            h = linear_tiled_pallas(
                h, w_p, b_p,
                out_f=dims[-1] if last else w_p.shape[1],
                activation=None if last else activation,
                out_dtype=final_dtype if last else w_p.dtype,
                tm=tm, tn=tn, tk=tk)
        return h

    def forward(x):
        if use_fused:
            try:
                return fused_mlp_pallas(x, prepared, activation, block_batch)
            except Exception:
                pass   # e.g. VMEM over-subscription: fall back to tiled path
        return tiled_forward(x)

    return forward


def mlp_forward(x, params, activation="relu", compute_dtype=None, **kwargs):
    """Convenience one-shot wrapper (re-prepares weights every call)."""
    return make_mlp_forward(params, activation, compute_dtype, **kwargs)(x)


def mlp_forward_ref(x, params, activation="relu"):
    """Pure-JAX f32 reference for correctness checking."""
    act = jnp.tanh if activation == "tanh" else (lambda v: jnp.maximum(v, 0.0))
    h = x
    for (w, b) in params[:-1]:
        h = act(h @ w.T + b)
    w, b = params[-1]
    return h @ w.T + b


def init_mlp_params(key, input_size, output_size, nlayers, hidden_size,
                    initialisation=None):
    """Parameter construction mirroring MLP.__init__ (weight (out,in), bias (1,out))."""
    params = []
    keys = jax.random.split(key, nlayers + 1)

    # First layer: nn.Linear default init (uniform in [-1/sqrt(in), 1/sqrt(in)]).
    bound = 1.0 / jnp.sqrt(jnp.float32(input_size))
    w0 = jax.random.uniform(keys[0], (hidden_size, input_size),
                            jnp.float32, -bound, bound)
    b0 = jax.random.uniform(keys[1], (1, hidden_size),
                            jnp.float32, -bound, bound)
    params.append((w0, b0))

    # Hidden layers: normal(std=0.1) weights, zero bias.
    if nlayers > 2:
        for i in range(1, nlayers - 1):
            w = 0.1 * jax.random.normal(keys[i + 1],
                                        (hidden_size, hidden_size), jnp.float32)
            b = jnp.zeros((1, hidden_size), jnp.float32)
            params.append((w, b))

    # Last layer.
    if initialisation == "zeros":
        wl = jnp.zeros((output_size, hidden_size), jnp.float32)
    else:
        wl = 0.1 * jax.random.normal(keys[nlayers],
                                     (output_size, hidden_size), jnp.float32)
    bl = jnp.zeros((1, output_size), jnp.float32)
    params.append((wl, bl))
    return params


if __name__ == "__main__":
    key = jax.random.PRNGKey(0)
    k_params, k_x, k_params2, k_x2 = jax.random.split(key, 4)

    # --- Small, module-consistent shapes: fused path -----------------------
    batch, input_size, hidden_size, output_size, nlayers = 8, 4, 32, 2, 3
    activation = "relu"

    params = init_mlp_params(k_params, input_size, output_size,
                             nlayers, hidden_size, initialisation=None)
    x = jax.random.normal(k_x, (batch, input_size), jnp.float32)
    y_ref = mlp_forward_ref(x, params, activation)

    # f32 operands (tight tolerance), weights prepared once.
    fwd_f32 = make_mlp_forward(params, activation)
    y_f32 = jax.block_until_ready(fwd_f32(x))
    assert y_f32.shape == (batch, output_size)
    assert jnp.allclose(y_f32, y_ref, atol=1e-5, rtol=1e-5)

    # bf16 matmul operands (native MXU dtype), f32 accumulate/epilogue.
    fwd_bf16 = make_mlp_forward(params, activation, compute_dtype=jnp.bfloat16)
    y_bf16 = jax.block_until_ready(fwd_bf16(x))
    assert jnp.allclose(y_bf16, y_ref, atol=2e-2, rtol=2e-2)

    # --- Larger shapes: exercise the tiled (K-reduction) path --------------
    batch2, in2, hid2, out2 = 256, 160, 192, 96
    params2 = init_mlp_params(k_params2, in2, out2, 3, hid2)
    x2 = jax.random.normal(k_x2, (batch2, in2), jnp.float32)
    y2_ref = mlp_forward_ref(x2, params2, "tanh")

    # f32 operands, tight tolerance (validates tiled kernel numerics).
    fwd2_f32 = make_mlp_forward(params2, "tanh", compute_dtype=jnp.float32,
                                force_tiled=True)
    y2_f32 = jax.block_until_ready(fwd2_f32(x2))
    assert y2_f32.shape == (batch2, out2)
    assert jnp.allclose(y2_f32, y2_ref, atol=1e-3, rtol=1e-3)

    # Default tiled path: bf16 MXU operands, f32 accumulate/epilogue.
    fwd2_bf16 = make_mlp_forward(params2, "tanh", force_tiled=True)
    y2_bf16 = jax.block_until_ready(fwd2_bf16(x2))
    assert jnp.allclose(y2_bf16, y2_ref, atol=5e-2, rtol=5e-2)

    print("KERNEL_OK")
</pallas_src>

<mosaic_0001>
module attributes {stable_mosaic.version = 11 : i64} {
  func.func @_fused_mlp_kernel(%arg0: i32, %arg1: memref<8x128xf32, #tpu.memory_space<vmem>>, %arg2: memref<128x128xf32, #tpu.memory_space<vmem>>, %arg3: memref<1x128xf32, #tpu.memory_space<vmem>>, %arg4: memref<128x128xf32, #tpu.memory_space<vmem>>, %arg5: memref<1x128xf32, #tpu.memory_space<vmem>>, %arg6: memref<128x128xf32, #tpu.memory_space<vmem>>, %arg7: memref<1x128xf32, #tpu.memory_space<vmem>>, %arg8: memref<8x128xf32, #tpu.memory_space<vmem>>) attributes {dimension_semantics = [#tpu.dimension_semantics<parallel>], iteration_bounds = array<i64: 1>, scalar_prefetch = 0 : i64, scratch_operands = 0 : i64, tpu.core_type = #tpu.core_type<tc>, window_params = [{transform_indices = @transform_0, window_bounds = array<i64: 8, 128>}, {pipeline_mode = #tpu.pipeline_mode<synchronous>, transform_indices = @transform_1, window_bounds = array<i64: 128, 128>}, {pipeline_mode = #tpu.pipeline_mode<synchronous>, transform_indices = @transform_2, window_bounds = array<i64: 1, 128>}, {pipeline_mode = #tpu.pipeline_mode<synchronous>, transform_indices = @transform_3, window_bounds = array<i64: 128, 128>}, {pipeline_mode = #tpu.pipeline_mode<synchronous>, transform_indices = @transform_4, window_bounds = array<i64: 1, 128>}, {pipeline_mode = #tpu.pipeline_mode<synchronous>, transform_indices = @transform_5, window_bounds = array<i64: 128, 128>}, {pipeline_mode = #tpu.pipeline_mode<synchronous>, transform_indices = @transform_6, window_bounds = array<i64: 1, 128>}, {transform_indices = @transform_7, window_bounds = array<i64: 8, 128>}]} {
    %c0 = arith.constant 0 : index
    %c0_0 = arith.constant 0 : index
    %0 = vector.load %arg1[%c0, %c0_0] : memref<8x128xf32, #tpu.memory_space<vmem>>, vector<8x128xf32>
    %c0_1 = arith.constant 0 : index
    %c0_2 = arith.constant 0 : index
    %1 = vector.load %arg2[%c0_1, %c0_2] : memref<128x128xf32, #tpu.memory_space<vmem>>, vector<128x128xf32>
    %c0_3 = arith.constant 0 : index
    %c0_4 = arith.constant 0 : index
    %2 = vector.load %arg3[%c0_3, %c0_4] : memref<1x128xf32, #tpu.memory_space<vmem>>, vector<1x128xf32>
    %cst = arith.constant dense<0.000000e+00> : vector<8x128xf32>
    %3 = tpu.matmul %0, %1, %cst {dimension_numbers = #tpu.dot_dimension_numbers<[1], [0], [0], [1], [0, 0, 1, 1], [], []>} : vector<8x128xf32>, vector<128x128xf32>, vector<8x128xf32> -> vector<8x128xf32>
    %4 = vector.broadcast %2 : vector<1x128xf32> to vector<8x128xf32>
    %5 = arith.addf %3, %4 : vector<8x128xf32>
    %cst_5 = arith.constant 0.000000e+00 : f32
    %6 = vector.broadcast %cst_5 : f32 to vector<8x128xf32>
    %7 = arith.maximumf %5, %6 : vector<8x128xf32>
    %c0_6 = arith.constant 0 : index
    %c0_7 = arith.constant 0 : index
    %8 = vector.load %arg4[%c0_6, %c0_7] : memref<128x128xf32, #tpu.memory_space<vmem>>, vector<128x128xf32>
    %c0_8 = arith.constant 0 : index
    %c0_9 = arith.constant 0 : index
    %9 = vector.load %arg5[%c0_8, %c0_9] : memref<1x128xf32, #tpu.memory_space<vmem>>, vector<1x128xf32>
    %cst_10 = arith.constant dense<0.000000e+00> : vector<8x128xf32>
    %10 = tpu.matmul %7, %8, %cst_10 {dimension_numbers = #tpu.dot_dimension_numbers<[1], [0], [0], [1], [0, 0, 1, 1], [], []>} : vector<8x128xf32>, vector<128x128xf32>, vector<8x128xf32> -> vector<8x128xf32>
    %11 = vector.broadcast %9 : vector<1x128xf32> to vector<8x128xf32>
    %12 = arith.addf %10, %11 : vector<8x128xf32>
    %cst_11 = arith.constant 0.000000e+00 : f32
    %13 = vector.broadcast %cst_11 : f32 to vector<8x128xf32>
    %14 = arith.maximumf %12, %13 : vector<8x128xf32>
    %c0_12 = arith.constant 0 : index
    %c0_13 = arith.constant 0 : index
    %15 = vector.load %arg6[%c0_12, %c0_13] : memref<128x128xf32, #tpu.memory_space<vmem>>, vector<128x128xf32>
    %c0_14 = arith.constant 0 : index
    %c0_15 = arith.constant 0 : index
    %16 = vector.load %arg7[%c0_14, %c0_15] : memref<1x128xf32, #tpu.memory_space<vmem>>, vector<1x128xf32>
    %cst_16 = arith.constant dense<0.000000e+00> : vector<8x128xf32>
    %17 = tpu.matmul %14, %15, %cst_16 {dimension_numbers = #tpu.dot_dimension_numbers<[1], [0], [0], [1], [0, 0, 1, 1], [], []>} : vector<8x128xf32>, vector<128x128xf32>, vector<8x128xf32> -> vector<8x128xf32>
    %18 = vector.broadcast %16 : vector<1x128xf32> to vector<8x128xf32>
    %19 = arith.addf %17, %18 : vector<8x128xf32>
    %c0_17 = arith.constant 0 : index
    %c0_18 = arith.constant 0 : index
    %20 = vector.load %arg8[%c0_17, %c0_18] : memref<8x128xf32, #tpu.memory_space<vmem>>, vector<8x128xf32>
    tpu.vector_store %arg8[%c0_17, %c0_18], %19 {strides = array<i32>} : memref<8x128xf32, #tpu.memory_space<vmem>>, vector<8x128xf32>,
    return
  }
  func.func @transform_0(%arg0: i32) -> (i32, i32) {
    %c0_i32 = arith.constant 0 : i32
    %c0_i32_0 = arith.constant 0 : i32
    return %arg0, %c0_i32 : i32, i32
  }
  func.func @transform_1(%arg0: i32) -> (i32, i32) {
    %c0_i32 = arith.constant 0 : i32
    %c0_i32_0 = arith.constant 0 : i32
    %c0_i32_1 = arith.constant 0 : i32
    return %c0_i32, %c0_i32_0 : i32, i32
  }
  func.func @transform_2(%arg0: i32) -> (i32, i32) {
    %c0_i32 = arith.constant 0 : i32
    %c0_i32_0 = arith.constant 0 : i32
    %c0_i32_1 = arith.constant 0 : i32
    return %c0_i32, %c0_i32_0 : i32, i32
  }
  func.func @transform_3(%arg0: i32) -> (i32, i32) {
    %c0_i32 = arith.constant 0 : i32
    %c0_i32_0 = arith.constant 0 : i32
    %c0_i32_1 = arith.constant 0 : i32
    return %c0_i32, %c0_i32_0 : i32, i32
  }
  func.func @transform_4(%arg0: i32) -> (i32, i32) {
    %c0_i32 = arith.constant 0 : i32
    %c0_i32_0 = arith.constant 0 : i32
    %c0_i32_1 = arith.constant 0 : i32
    return %c0_i32, %c0_i32_0 : i32, i32
  }
  func.func @transform_5(%arg0: i32) -> (i32, i32) {
    %c0_i32 = arith.constant 0 : i32
    %c0_i32_0 = arith.constant 0 : i32
    %c0_i32_1 = arith.constant 0 : i32
    return %c0_i32, %c0_i32_0 : i32, i32
  }
  func.func @transform_6(%arg0: i32) -> (i32, i32) {
    %c0_i32 = arith.constant 0 : i32
    %c0_i32_0 = arith.constant 0 : i32
    %c0_i32_1 = arith.constant 0 : i32
    return %c0_i32, %c0_i32_0 : i32, i32
  }
  func.func @transform_7(%arg0: i32) -> (i32, i32) {
    %c0_i32 = arith.constant 0 : i32
    %c0_i32_0 = arith.constant 0 : i32
    return %arg0, %c0_i32 : i32, i32
  }
}

module attributes {stable_mosaic.version = 11 : i64} {
  func.func @_fused_mlp_kernel(%arg0: i32, %arg1: memref<8x128xf32, #tpu.memory_space<vmem>>, %arg2: memref<128x128xf32, #tpu.memory_space<vmem>>, %arg3: memref<1x128xf32, #tpu.memory_space<vmem>>, %arg4: memref<128x128xf32, #tpu.memory_space<vmem>>, %arg5: memref<1x128xf32, #tpu.memory_space<vmem>>, %arg6: memref<128x128xf32, #tpu.memory_space<vmem>>, %arg7: memref<1x128xf32, #tpu.memory_space<vmem>>, %arg8: memref<8x128xf32, #tpu.memory_space<vmem>>) attributes {dimension_semantics = [#tpu.dimension_semantics<parallel>], iteration_bounds = array<i64: 1>, scalar_prefetch = 0 : i64, scratch_operands = 0 : i64, tpu.core_type = #tpu.core_type<tc>, window_params = [{transform_indices = @transform_0, window_bounds = array<i64: 8, 128>}, {pipeline_mode = #tpu.pipeline_mode<synchronous>, transform_indices = @transform_1, window_bounds = array<i64: 128, 128>}, {pipeline_mode = #tpu.pipeline_mode<synchronous>, transform_indices = @transform_2, window_bounds = array<i64: 1, 128>}, {pipeline_mode = #tpu.pipeline_mode<synchronous>, transform_indices = @transform_3, window_bounds = array<i64: 128, 128>}, {pipeline_mode = #tpu.pipeline_mode<synchronous>, transform_indices = @transform_4, window_bounds = array<i64: 1, 128>}, {pipeline_mode = #tpu.pipeline_mode<synchronous>, transform_indices = @transform_5, window_bounds = array<i64: 128, 128>}, {pipeline_mode = #tpu.pipeline_mode<synchronous>, transform_indices = @transform_6, window_bounds = array<i64: 1, 128>}, {transform_indices = @transform_7, window_bounds = array<i64: 8, 128>}]} {
    %c0 = arith.constant 0 : index
    %c0_0 = arith.constant 0 : index
    %0 = vector.load %arg1[%c0, %c0_0] : memref<8x128xf32, #tpu.memory_space<vmem>>, vector<8x128xf32>
    %c0_1 = arith.constant 0 : index
    %c0_2 = arith.constant 0 : index
    %1 = vector.load %arg2[%c0_1, %c0_2] : memref<128x128xf32, #tpu.memory_space<vmem>>, vector<128x128xf32>
    %c0_3 = arith.constant 0 : index
    %c0_4 = arith.constant 0 : index
    %2 = vector.load %arg3[%c0_3, %c0_4] : memref<1x128xf32, #tpu.memory_space<vmem>>, vector<1x128xf32>
    %cst = arith.constant dense<0.000000e+00> : vector<8x128xf32>
    %3 = tpu.matmul %0, %1, %cst {dimension_numbers = #tpu.dot_dimension_numbers<[1], [0], [0], [1], [0, 0, 1, 1], [], []>} : vector<8x128xf32>, vector<128x128xf32>, vector<8x128xf32> -> vector<8x128xf32>
    %4 = vector.broadcast %2 : vector<1x128xf32> to vector<8x128xf32>
    %5 = arith.addf %3, %4 : vector<8x128xf32>
    %cst_5 = arith.constant 0.000000e+00 : f32
    %6 = vector.broadcast %cst_5 : f32 to vector<8x128xf32>
    %7 = arith.maximumf %5, %6 : vector<8x128xf32>
    %c0_6 = arith.constant 0 : index
    %c0_7 = arith.constant 0 : index
    %8 = vector.load %arg4[%c0_6, %c0_7] : memref<128x128xf32, #tpu.memory_space<vmem>>, vector<128x128xf32>
    %c0_8 = arith.constant 0 : index
    %c0_9 = arith.constant 0 : index
    %9 = vector.load %arg5[%c0_8, %c0_9] : memref<1x128xf32, #tpu.memory_space<vmem>>, vector<1x128xf32>
    %cst_10 = arith.constant dense<0.000000e+00> : vector<8x128xf32>
    %10 = tpu.matmul %7, %8, %cst_10 {dimension_numbers = #tpu.dot_dimension_numbers<[1], [0], [0], [1], [0, 0, 1, 1], [], []>} : vector<8x128xf32>, vector<128x128xf32>, vector<8x128xf32> -> vector<8x128xf32>
    %11 = vector.broadcast %9 : vector<1x128xf32> to vector<8x128xf32>
    %12 = arith.addf %10, %11 : vector<8x128xf32>
    %cst_11 = arith.constant 0.000000e+00 : f32
    %13 = vector.broadcast %cst_11 : f32 to vector<8x128xf32>
    %14 = arith.maximumf %12, %13 : vector<8x128xf32>
    %c0_12 = arith.constant 0 : index
    %c0_13 = arith.constant 0 : index
    %15 = vector.load %arg6[%c0_12, %c0_13] : memref<128x128xf32, #tpu.memory_space<vmem>>, vector<128x128xf32>
    %c0_14 = arith.constant 0 : index
    %c0_15 = arith.constant 0 : index
    %16 = vector.load %arg7[%c0_14, %c0_15] : memref<1x128xf32, #tpu.memory_space<vmem>>, vector<1x128xf32>
    %cst_16 = arith.constant dense<0.000000e+00> : vector<8x128xf32>
    %17 = tpu.matmul %14, %15, %cst_16 {dimension_numbers = #tpu.dot_dimension_numbers<[1], [0], [0], [1], [0, 0, 1, 1], [], []>} : vector<8x128xf32>, vector<128x128xf32>, vector<8x128xf32> -> vector<8x128xf32>
    %18 = vector.broadcast %16 : vector<1x128xf32> to vector<8x128xf32>
    %19 = arith.addf %17, %18 : vector<8x128xf32>
    %c0_17 = arith.constant 0 : index
    %c0_18 = arith.constant 0 : index
    %20 = vector.load %arg8[%c0_17, %c0_18] : memref<8x128xf32, #tpu.memory_space<vmem>>, vector<8x128xf32>
    tpu.vector_store %arg8[%c0_17, %c0_18], %19 {strides = array<i32>} : memref<8x128xf32, #tpu.memory_space<vmem>>, vector<8x128xf32>,
    return
  }
  func.func @transform_0(%arg0: i32) -> (i32, i32) {
    %c0_i32 = arith.constant 0 : i32
    %c0_i32_0 = arith.constant 0 : i32
    return %arg0, %c0_i32 : i32, i32
  }
  func.func @transform_1(%arg0: i32) -> (i32, i32) {
    %c0_i32 = arith.constant 0 : i32
    %c0_i32_0 = arith.constant 0 : i32
    %c0_i32_1 = arith.constant 0 : i32
    return %c0_i32, %c0_i32_0 : i32, i32
  }
  func.func @transform_2(%arg0: i32) -> (i32, i32) {
    %c0_i32 = arith.constant 0 : i32
    %c0_i32_0 = arith.constant 0 : i32
    %c0_i32_1 = arith.constant 0 : i32
    return %c0_i32, %c0_i32_0 : i32, i32
  }
  func.func @transform_3(%arg0: i32) -> (i32, i32) {
    %c0_i32 = arith.constant 0 : i32
    %c0_i32_0 = arith.constant 0 : i32
    %c0_i32_1 = arith.constant 0 : i32
    return %c0_i32, %c0_i32_0 : i32, i32
  }
  func.func @transform_4(%arg0: i32) -> (i32, i32) {
    %c0_i32 = arith.constant 0 : i32
    %c0_i32_0 = arith.constant 0 : i32
    %c0_i32_1 = arith.constant 0 : i32
    return %c0_i32, %c0_i32_0 : i32, i32
  }
  func.func @transform_5(%arg0: i32) -> (i32, i32) {
    %c0_i32 = arith.constant 0 : i32
    %c0_i32_0 = arith.constant 0 : i32
    %c0_i32_1 = arith.constant 0 : i32
    return %c0_i32, %c0_i32_0 : i32, i32
  }
  func.func @transform_6(%arg0: i32) -> (i32, i32) {
    %c0_i32 = arith.constant 0 : i32
    %c0_i32_0 = arith.constant 0 : i32
    %c0_i32_1 = arith.constant 0 : i32
    return %c0_i32, %c0_i32_0 : i32, i32
  }
  func.func @transform_7(%arg0: i32) -> (i32, i32) {
    %c0_i32 = arith.constant 0 : i32
    %c0_i32_0 = arith.constant 0 : i32
    return %arg0, %c0_i32 : i32, i32
  }
}

module attributes {stable_mosaic.version = 11 : i64} {
  func.func @_linear_tiled_kernel(%arg0: i32, %arg1: i32, %arg2: i32, %arg3: memref<8x128xf32, #tpu.memory_space<vmem>>, %arg4: memref<128x128xf32, #tpu.memory_space<vmem>>, %arg5: memref<1x128xf32, #tpu.memory_space<vmem>>, %arg6: memref<8x128xf32, #tpu.memory_space<vmem>>, %arg7: memref<8x128xf32, #tpu.memory_space<vmem>>) attributes {dimension_semantics = [#tpu.dimension_semantics<parallel>, #tpu.dimension_semantics<parallel>, #tpu.dimension_semantics<arbitrary>], iteration_bounds = array<i64: 1, 1, 1>, scalar_prefetch = 0 : i64, scratch_operands = 1 : i64, tpu.core_type = #tpu.core_type<tc>, window_params = [{transform_indices = @transform_0, window_bounds = array<i64: 8, 128>}, {transform_indices = @transform_1, window_bounds = array<i64: 128, 128>}, {transform_indices = @transform_2, window_bounds = array<i64: 1, 128>}, {transform_indices = @transform_3, window_bounds = array<i64: 8, 128>}]} {
    %c0_i32 = arith.constant 0 : i32
    %0 = arith.cmpi eq, %arg2, %c0_i32 : i32
    %1 = arith.extui %0 : i1 to i32
    %c0_i32_0 = arith.constant 0 : i32
    %2 = arith.cmpi ne, %1, %c0_i32_0 : i32
    scf.if %2 {
      %cst_10 = arith.constant 0.000000e+00 : f32
      %12 = vector.broadcast %cst_10 : f32 to vector<8x128xf32>
      %c0_11 = arith.constant 0 : index
      %c0_12 = arith.constant 0 : index
      %13 = vector.load %arg7[%c0_11, %c0_12] : memref<8x128xf32, #tpu.memory_space<vmem>>, vector<8x128xf32>
      tpu.vector_store %arg7[%c0_11, %c0_12], %12 {strides = array<i32>} : memref<8x128xf32, #tpu.memory_space<vmem>>, vector<8x128xf32>,
    } else {
    }
    %c0 = arith.constant 0 : index
    %c0_1 = arith.constant 0 : index
    %3 = vector.load %arg7[%c0, %c0_1] : memref<8x128xf32, #tpu.memory_space<vmem>>, vector<8x128xf32>
    %c0_2 = arith.constant 0 : index
    %c0_3 = arith.constant 0 : index
    %4 = vector.load %arg3[%c0_2, %c0_3] : memref<8x128xf32, #tpu.memory_space<vmem>>, vector<8x128xf32>
    %c0_4 = arith.constant 0 : index
    %c0_5 = arith.constant 0 : index
    %5 = vector.load %arg4[%c0_4, %c0_5] : memref<128x128xf32, #tpu.memory_space<vmem>>, vector<128x128xf32>
    %cst = arith.constant dense<0.000000e+00> : vector<8x128xf32>
    %6 = tpu.matmul %4, %5, %cst {dimension_numbers = #tpu.dot_dimension_numbers<[1], [0], [0], [1], [0, 0, 1, 1], [], []>} : vector<8x128xf32>, vector<128x128xf32>, vector<8x128xf32> -> vector<8x128xf32>
    %7 = arith.addf %3, %6 : vector<8x128xf32>
    %c0_6 = arith.constant 0 : index
    %c0_7 = arith.constant 0 : index
    %8 = vector.load %arg7[%c0_6, %c0_7] : memref<8x128xf32, #tpu.memory_space<vmem>>, vector<8x128xf32>
    tpu.vector_store %arg7[%c0_6, %c0_7], %7 {strides = array<i32>} : memref<8x128xf32, #tpu.memory_space<vmem>>, vector<8x128xf32>,
    %c0_i32_8 = arith.constant 0 : i32
    %9 = arith.cmpi eq, %arg2, %c0_i32_8 : i32
    %10 = arith.extui %9 : i1 to i32
    %c0_i32_9 = arith.constant 0 : i32
    %11 = arith.cmpi ne, %10, %c0_i32_9 : i32
    scf.if %11 {
      %c0_10 = arith.constant 0 : index
      %c0_11 = arith.constant 0 : index
      %12 = vector.load %arg7[%c0_10, %c0_11] : memref<8x128xf32, #tpu.memory_space<vmem>>, vector<8x128xf32>
      %c0_12 = arith.constant 0 : index
      %c0_13 = arith.constant 0 : index
      %13 = vector.load %arg5[%c0_12, %c0_13] : memref<1x128xf32, #tpu.memory_space<vmem>>, vector<1x128xf32>
      %14 = vector.broadcast %13 : vector<1x128xf32> to vector<8x128xf32>
      %15 = arith.addf %12, %14 : vector<8x128xf32>
      %cst_14 = arith.constant 0.000000e+00 : f32
      %16 = vector.broadcast %cst_14 : f32 to vector<8x128xf32>
      %17 = arith.maximumf %15, %16 : vector<8x128xf32>
      %c0_15 = arith.constant 0 : index
      %c0_16 = arith.constant 0 : index
      %18 = vector.load %arg6[%c0_15, %c0_16] : memref<8x128xf32, #tpu.memory_space<vmem>>, vector<8x128xf32>
      tpu.vector_store %arg6[%c0_15, %c0_16], %17 {strides = array<i32>} : memref<8x128xf32, #tpu.memory_space<vmem>>, vector<8x128xf32>,
    } else {
    }
    return
  }
  func.func @transform_0(%arg0: i32, %arg1: i32, %arg2: i32) -> (i32, i32) {
    %c0_i32 = arith.constant 0 : i32
    return %arg0, %arg2 : i32, i32
  }
  func.func @transform_1(%arg0: i32, %arg1: i32, %arg2: i32) -> (i32, i32) {
    %c0_i32 = arith.constant 0 : i32
    return %arg2, %arg1 : i32, i32
  }
  func.func @transform_2(%arg0: i32, %arg1: i32, %arg2: i32) -> (i32, i32) {
    %c0_i32 = arith.constant 0 : i32
    %c0_i32_0 = arith.constant 0 : i32
    return %c0_i32, %arg1 : i32, i32
  }
  func.func @transform_3(%arg0: i32, %arg1: i32, %arg2: i32) -> (i32, i32) {
    %c0_i32 = arith.constant 0 : i32
    return %arg0, %arg1 : i32, i32
  }
}

</mosaic_0001>

<llo_original>
// kernel: tpu_custom_call.1
$region0: #{tpu_custom_call.1}
  #allocation0 [shape = 'u32[]', space=smem, size = 0x4, offset = 0x4, fixed_abs, tag = 'smem constant byte address 0x4 - core index']
  #allocation1 [shape = 'u32[144,128]{1,0:T(1,128)}', space=vmem, size = 0x12000, scoped, tag = 'internal scratch']
  %s0 = inlined_call_operand.hbm [shape: f32[8,128], index: 0, kind: input, shape index: {}]
  %s1 = inlined_call_operand.hbm [shape: f32[128,128], index: 1, kind: input, shape index: {}]
  %s2 = inlined_call_operand.vmem [shape: f32[1,128], index: 2, kind: input, shape index: {}]
  %s3 = inlined_call_operand.hbm [shape: f32[128,128], index: 3, kind: input, shape index: {}]
  %s4 = inlined_call_operand.vmem [shape: f32[1,128], index: 4, kind: input, shape index: {}]
  %s5 = inlined_call_operand.hbm [shape: f32[128,128], index: 5, kind: input, shape index: {}]
  %s6 = inlined_call_operand.vmem [shape: f32[1,128], index: 6, kind: input, shape index: {}]
  %s7 = inlined_call_operand.hbm [shape: f32[8,128], index: 7, kind: output, shape index: {}]
  %s8 = sld [smem:[#allocation0]]
  $region54: #{tpu_custom_call.1} parent=0
    _
  %s10 = ssub.s32 1, %s8
  %s11 = scalar_select 0, %s10, %s8
  $region1: #{tpu_custom_call.1} parent=0
    #allocation2 [shape = 'u8[4096]{0}', space=vmem, size = 0x1000, scoped, tag = 'input window, operand 0, single buffered']
    #allocation3 [shape = 's32[1]{0}', space=sflag, size = 0x4, scoped, tag = 'scoped memory for tpu_custom_call.1']
    #allocation4 [shape = 's32[1]{0}', space=sflag, size = 0x4, scoped, tag = 'scoped memory for tpu_custom_call.1']
    #allocation5 [shape = 'u8[65536]{0}', space=vmem, size = 0x10000, scoped, tag = 'input window, operand 1, single buffered']
    #allocation6 [shape = 's32[1]{0}', space=sflag, size = 0x4, scoped, tag = 'scoped memory for tpu_custom_call.1']
    #allocation7 [shape = 'u8[65536]{0}', space=vmem, size = 0x10000, scoped, tag = 'input window, operand 3, single buffered']
    #allocation8 [shape = 'u8[65536]{0}', space=vmem, size = 0x10000, scoped, tag = 'input window, operand 5, single buffered']
    #allocation9 [shape = 's32[1]{0}', space=sflag, size = 0x4, scoped, tag = 'scoped memory for tpu_custom_call.1']
    #allocation10 [shape = 'u8[4096]{0}', space=vmem, size = 0x1000, scoped, tag = 'output window, operand 0, single buffered']
    %12 = vsyncpa [#allocation3], 0
    %13 = vsyncpa [#allocation6], 0
    %14 = vsyncpa [#allocation9], 0
    %15 = vsyncpa [#allocation4], 0
    // Predicated region
    $region2: #{tpu_custom_call.1} parent=1 // pred_check
      _
    $region3: #{tpu_custom_call.1} parent=1 // pred_check_branch
      %17 = sbr.rel (0) target = $region5
    $region4: #{tpu_custom_call.1} parent=1 // pred_region
      %s19 = ssub.s32 128, 128
      %20 = vsyncadd [#allocation3], %s19
      %s22 = sshll.u32 [#allocation2], 4
      %s23 = int_to_ptr.vmem [resolvable:$true] %s22
      %25 = dma.hbm_to_vmem [thread:$0]  %s0, 128, %s23, [#allocation3]
    $region5: #{tpu_custom_call.1} parent=1 // pred_fallthru
      _
    // Predicated region
    $region6: #{tpu_custom_call.1} parent=1 // pred_check
      _
    $region7: #{tpu_custom_call.1} parent=1 // pred_check_branch
      %27 = sbr.rel (0) target = $region9
    $region8: #{tpu_custom_call.1} parent=1 // pred_region
      %s29 = ssub.s32 2048, 2048
      %30 = vsyncadd [#allocation6], %s29
      %s31 = sshll.u32 [#allocation5], 4
      %s32 = int_to_ptr.vmem [resolvable:$true] %s31
      %37 = dma.hbm_to_vmem [thread:$0]  %s1, 2048, %s32, [#allocation6], 128, 128, 8
    $region9: #{tpu_custom_call.1} parent=1 // pred_fallthru
      _
    // Predicated region
    $region10: #{tpu_custom_call.1} parent=1 // pred_check
      _
    $region11: #{tpu_custom_call.1} parent=1 // pred_check_branch
      %39 = sbr.rel (0) target = $region13
    $region12: #{tpu_custom_call.1} parent=1 // pred_region
      _
    $region13: #{tpu_custom_call.1} parent=1 // pred_fallthru
      _
    // Predicated region
    $region14: #{tpu_custom_call.1} parent=1 // pred_check
      _
    $region15: #{tpu_custom_call.1} parent=1 // pred_check_branch
      %41 = sbr.rel (0) target = $region17
    $region16: #{tpu_custom_call.1} parent=1 // pred_region
      %s43 = ssub.s32 2048, 2048
      %44 = vsyncadd [#allocation6], %s43
      %s45 = sshll.u32 [#allocation7], 4
      %s46 = int_to_ptr.vmem [resolvable:$true] %s45
      %51 = dma.hbm_to_vmem [thread:$0]  %s3, 2048, %s46, [#allocation6], 128, 128, 8
    $region17: #{tpu_custom_call.1} parent=1 // pred_fallthru
      _
    // Predicated region
    $region18: #{tpu_custom_call.1} parent=1 // pred_check
      _
    $region19: #{tpu_custom_call.1} parent=1 // pred_check_branch
      %53 = sbr.rel (0) target = $region21
    $region20: #{tpu_custom_call.1} parent=1 // pred_region
      _
    $region21: #{tpu_custom_call.1} parent=1 // pred_fallthru
      _
    // Predicated region
    $region22: #{tpu_custom_call.1} parent=1 // pred_check
      _
    $region23: #{tpu_custom_call.1} parent=1 // pred_check_branch
      %55 = sbr.rel (0) target = $region25
    $region24: #{tpu_custom_call.1} parent=1 // pred_region
      %s57 = ssub.s32 2048, 2048
      %58 = vsyncadd [#allocation9], %s57
      %s59 = sshll.u32 [#allocation8], 4
      %s60 = int_to_ptr.vmem [resolvable:$true] %s59
      %65 = dma.hbm_to_vmem [thread:$0]  %s5, 2048, %s60, [#allocation9], 128, 128, 8
    $region25: #{tpu_custom_call.1} parent=1 // pred_fallthru
      _
    // Predicated region
    $region26: #{tpu_custom_call.1} parent=1 // pred_check
      _
    $region27: #{tpu_custom_call.1} parent=1 // pred_check_branch
      %67 = sbr.rel (0) target = $region29
    $region28: #{tpu_custom_call.1} parent=1 // pred_region
      _
    $region29: #{tpu_custom_call.1} parent=1 // pred_fallthru
      _
    // Predicated region
    $region30: #{tpu_custom_call.1} parent=1 // pred_check
      _
    $region31: #{tpu_custom_call.1} parent=1 // pred_check_branch
      %69 = sbr.rel (0) target = $region33
    $region32: #{tpu_custom_call.1} parent=1 // pred_region
      %70 = dma.done [#allocation3], 128
    $region33: #{tpu_custom_call.1} parent=1 // pred_fallthru
      _
    // Predicated region
    $region34: #{tpu_custom_call.1} parent=1 // pred_check
      _
    $region35: #{tpu_custom_call.1} parent=1 // pred_check_branch
      %72 = sbr.rel (0) target = $region37
    $region36: #{tpu_custom_call.1} parent=1 // pred_region
      %73 = dma.done [#allocation6], 2048
    $region37: #{tpu_custom_call.1} parent=1 // pred_fallthru
      _
    // Predicated region
    $region38: #{tpu_custom_call.1} parent=1 // pred_check
      _
    $region39: #{tpu_custom_call.1} parent=1 // pred_check_branch
      %75 = sbr.rel (0) target = $region41
    $region40: #{tpu_custom_call.1} parent=1 // pred_region
      %76 = dma.done [#allocation6], 2048
    $region41: #{tpu_custom_call.1} parent=1 // pred_fallthru
      _
    // Predicated region
    $region42: #{tpu_custom_call.1} parent=1 // pred_check
      _
    $region43: #{tpu_custom_call.1} parent=1 // pred_check_branch
      %78 = sbr.rel (0) target = $region45
    $region44: #{tpu_custom_call.1} parent=1 // pred_region
      %79 = dma.done [#allocation9], 2048
    $region45: #{tpu_custom_call.1} parent=1 // pred_fallthru
      _
    %v80 = vld [vmem:[#allocation2] sm:$0xff]
    %v81 = vld [vmem:[#allocation5] sm:$0xff]
    %v82 = vld [vmem:[#allocation5 + $0x8] sm:$0xff]
    %v83 = vld [vmem:[#allocation5 + $0x10] sm:$0xff]
    %v84 = vld [vmem:[#allocation5 + $0x18] sm:$0xff]
    %v85 = vld [vmem:[#allocation5 + $0x20] sm:$0xff]
    %v86 = vld [vmem:[#allocation5 + $0x28] sm:$0xff]
    %v87 = vld [vmem:[#allocation5 + $0x30] sm:$0xff]
    %v88 = vld [vmem:[#allocation5 + $0x38] sm:$0xff]
    %v89 = vld [vmem:[#allocation5 + $0x40] sm:$0xff]
    %v90 = vld [vmem:[#allocation5 + $0x48] sm:$0xff]
    %v91 = vld [vmem:[#allocation5 + $0x50] sm:$0xff]
    %v92 = vld [vmem:[#allocation5 + $0x58] sm:$0xff]
    %v93 = vld [vmem:[#allocation5 + $0x60] sm:$0xff]
    %v94 = vld [vmem:[#allocation5 + $0x68] sm:$0xff]
    %v95 = vld [vmem:[#allocation5 + $0x70] sm:$0xff]
    %v96 = vld [vmem:[#allocation5 + $0x78] sm:$0xff]
    %v97 = vld [vmem:[%s2] sm:$0x1]
    %v99 = vlaneseq
    %v100 = vshrl.u32 %v99, 7
    %v101 = vsub.s32 0, %v100
    %v102 = vrot.slane %v97, %v101
    %104 = vmatprep.subr.mxu0 0.0
    %105 = vmatpush1.msra.mxu0 %v81
    %106 = vmatprep.subr.mxu0 0.0
    %107 = vmatpush1.msra.mxu0 %v82
    %108 = vmatprep.subr.mxu0 0.0
    %109 = vmatpush1.msra.mxu0 %v83
    %110 = vmatprep.subr.mxu0 0.0
    %111 = vmatpush1.msra.mxu0 %v84
    %112 = vmatprep.subr.mxu0 0.0
    %113 = vmatpush1.msra.mxu0 %v85
    %114 = vmatprep.subr.mxu0 0.0
    %115 = vmatpush1.msra.mxu0 %v86
    %116 = vmatprep.subr.mxu0 0.0
    %117 = vmatpush1.msra.mxu0 %v87
    %118 = vmatprep.subr.mxu0 0.0
    %119 = vmatpush1.msra.mxu0 %v88
    %120 = vmatprep.subr.mxu0 0.0
    %121 = vmatpush1.msra.mxu0 %v89
    %122 = vmatprep.subr.mxu0 0.0
    %123 = vmatpush1.msra.mxu0 %v90
    %124 = vmatprep.subr.mxu0 0.0
    %125 = vmatpush1.msra.mxu0 %v91
    %126 = vmatprep.subr.mxu0 0.0
    %127 = vmatpush1.msra.mxu0 %v92
    %128 = vmatprep.subr.mxu0 0.0
    %129 = vmatpush1.msra.mxu0 %v93
    %130 = vmatprep.subr.mxu0 0.0
    %131 = vmatpush1.msra.mxu0 %v94
    %132 = vmatprep.subr.mxu0 0.0
    %133 = vmatpush1.msra.mxu0 %v95
    %134 = vmatprep.subr.mxu0 0.0
    %135 = vmatpush1.msra.mxu0 %v96
    %136 = vmatprep.subr.mxu0 0.0
    %137 = vmatpush1.msra.mxu0 0.0
    %138 = vmatprep.subr.mxu0 0.0
    %139 = vmatpush1.msra.mxu0 0.0
    %140 = vmatprep.subr.mxu0 0.0
    %141 = vmatpush1.msra.mxu0 0.0
    %142 = vmatprep.subr.mxu0 0.0
    %143 = vmatpush1.msra.mxu0 0.0
    %144 = vmatprep.subr.mxu0 0.0
    %145 = vmatpush1.msra.mxu0 0.0
    %146 = vmatprep.subr.mxu0 0.0
    %147 = vmatpush1.msra.mxu0 0.0
    %148 = vmatprep.subr.mxu0 0.0
    %149 = vmatpush1.msra.mxu0 0.0
    %150 = vmatprep.subr.mxu0 0.0
    %151 = vmatpush1.msra.mxu0 0.0
    %152 = vmatprep.subr.mxu0 0.0
    %153 = vmatpush1.msra.mxu0 0.0
    %154 = vmatprep.subr.mxu0 0.0
    %155 = vmatpush1.msra.mxu0 0.0
    %156 = vmatprep.subr.mxu0 0.0
    %157 = vmatpush1.msra.mxu0 0.0
    %158 = vmatprep.subr.mxu0 0.0
    %159 = vmatpush1.msra.mxu0 0.0
    %160 = vmatprep.subr.mxu0 0.0
    %161 = vmatpush1.msra.mxu0 0.0
    %162 = vmatprep.subr.mxu0 0.0
    %163 = vmatpush1.msra.mxu0 0.0
    %164 = vmatprep.subr.mxu0 0.0
    %165 = vmatpush1.msra.mxu0 0.0
    %166 = vmatprep.subr.mxu0 0.0
    %167 = vmatpush1.msra.mxu0 0.0
    %168 = vmatprep.mubr.f32.mxu0 0.0
    %169 = vmatmul.mubr.f32.gmra.mrb[0].mxu0 %v80
    %v170 = vpop.f32.mrb[0].mxu0
    %v171 = vadd.f32 %v102, %v170
    %v172 = vpop.f32.mrb[0].mxu0
    %173 = vdwg.mxu0
    %v174 = vmax.f32 %v171, 0.0
    %v175 = vld [vmem:[#allocation7] sm:$0xff]
    %v176 = vld [vmem:[#allocation7 + $0x8] sm:$0xff]
    %v177 = vld [vmem:[#allocation7 + $0x10] sm:$0xff]
    %v178 = vld [vmem:[#allocation7 + $0x18] sm:$0xff]
    %v179 = vld [vmem:[#allocation7 + $0x20] sm:$0xff]
    %v180 = vld [vmem:[#allocation7 + $0x28] sm:$0xff]
    %v181 = vld [vmem:[#allocation7 + $0x30] sm:$0xff]
    %v182 = vld [vmem:[#allocation7 + $0x38] sm:$0xff]
    %v183 = vld [vmem:[#allocation7 + $0x40] sm:$0xff]
    %v184 = vld [vmem:[#allocation7 + $0x48] sm:$0xff]
    %v185 = vld [vmem:[#allocation7 + $0x50] sm:$0xff]
    %v186 = vld [vmem:[#allocation7 + $0x58] sm:$0xff]
    %v187 = vld [vmem:[#allocation7 + $0x60] sm:$0xff]
    %v188 = vld [vmem:[#allocation7 + $0x68] sm:$0xff]
    %v189 = vld [vmem:[#allocation7 + $0x70] sm:$0xff]
    %v190 = vld [vmem:[#allocation7 + $0x78] sm:$0xff]
    %v191 = vld [vmem:[%s4] sm:$0x1]
    %v193 = vlaneseq
    %v194 = vshrl.u32 %v193, 7
    %v195 = vsub.s32 0, %v194
    %v196 = vrot.slane %v191, %v195
    %198 = vmatprep.subr.mxu0 0.0
    %199 = vmatpush1.msra.mxu0 %v175
    %200 = vmatprep.subr.mxu0 0.0
    %201 = vmatpush1.msra.mxu0 %v176
    %202 = vmatprep.subr.mxu0 0.0
    %203 = vmatpush1.msra.mxu0 %v177
    %204 = vmatprep.subr.mxu0 0.0
    %205 = vmatpush1.msra.mxu0 %v178
    %206 = vmatprep.subr.mxu0 0.0
    %207 = vmatpush1.msra.mxu0 %v179
    %208 = vmatprep.subr.mxu0 0.0
    %209 = vmatpush1.msra.mxu0 %v180
    %210 = vmatprep.subr.mxu0 0.0
    %211 = vmatpush1.msra.mxu0 %v181
    %212 = vmatprep.subr.mxu0 0.0
    %213 = vmatpush1.msra.mxu0 %v182
    %214 = vmatprep.subr.mxu0 0.0
    %215 = vmatpush1.msra.mxu0 %v183
    %216 = vmatprep.subr.mxu0 0.0
    %217 = vmatpush1.msra.mxu0 %v184
    %218 = vmatprep.subr.mxu0 0.0
    %219 = vmatpush1.msra.mxu0 %v185
    %220 = vmatprep.subr.mxu0 0.0
    %221 = vmatpush1.msra.mxu0 %v186
    %222 = vmatprep.subr.mxu0 0.0
    %223 = vmatpush1.msra.mxu0 %v187
    %224 = vmatprep.subr.mxu0 0.0
    %225 = vmatpush1.msra.mxu0 %v188
    %226 = vmatprep.subr.mxu0 0.0
    %227 = vmatpush1.msra.mxu0 %v189
    %228 = vmatprep.subr.mxu0 0.0
    %229 = vmatpush1.msra.mxu0 %v190
    %230 = vmatprep.subr.mxu0 0.0
    %231 = vmatpush1.msra.mxu0 0.0
    %232 = vmatprep.subr.mxu0 0.0
    %233 = vmatpush1.msra.mxu0 0.0
    %234 = vmatprep.subr.mxu0 0.0
    %235 = vmatpush1.msra.mxu0 0.0
    %236 = vmatprep.subr.mxu0 0.0
    %237 = vmatpush1.msra.mxu0 0.0
    %238 = vmatprep.subr.mxu0 0.0
    %239 = vmatpush1.msra.mxu0 0.0
    %240 = vmatprep.subr.mxu0 0.0
    %241 = vmatpush1.msra.mxu0 0.0
    %242 = vmatprep.subr.mxu0 0.0
    %243 = vmatpush1.msra.mxu0 0.0
    %244 = vmatprep.subr.mxu0 0.0
    %245 = vmatpush1.msra.mxu0 0.0
    %246 = vmatprep.subr.mxu0 0.0
    %247 = vmatpush1.msra.mxu0 0.0
    %248 = vmatprep.subr.mxu0 0.0
    %249 = vmatpush1.msra.mxu0 0.0
    %250 = vmatprep.subr.mxu0 0.0
    %251 = vmatpush1.msra.mxu0 0.0
    %252 = vmatprep.subr.mxu0 0.0
    %253 = vmatpush1.msra.mxu0 0.0
    %254 = vmatprep.subr.mxu0 0.0
    %255 = vmatpush1.msra.mxu0 0.0
    %256 = vmatprep.subr.mxu0 0.0
    %257 = vmatpush1.msra.mxu0 0.0
    %258 = vmatprep.subr.mxu0 0.0
    %259 = vmatpush1.msra.mxu0 0.0
    %260 = vmatprep.subr.mxu0 0.0
    %261 = vmatpush1.msra.mxu0 0.0
    %262 = vmatprep.mubr.f32.mxu0 0.0
    %263 = vmatmul.mubr.f32.gmra.mrb[0].mxu0 %v174
    %v264 = vpop.f32.mrb[0].mxu0
    %v265 = vadd.f32 %v196, %v264
    %v266 = vpop.f32.mrb[0].mxu0
    %267 = vdwg.mxu0
    %v268 = vmax.f32 %v265, 0.0
    %v269 = vld [vmem:[#allocation8] sm:$0xff]
    %v270 = vld [vmem:[#allocation8 + $0x8] sm:$0xff]
    %v271 = vld [vmem:[#allocation8 + $0x10] sm:$0xff]
    %v272 = vld [vmem:[#allocation8 + $0x18] sm:$0xff]
    %v273 = vld [vmem:[#allocation8 + $0x20] sm:$0xff]
    %v274 = vld [vmem:[#allocation8 + $0x28] sm:$0xff]
    %v275 = vld [vmem:[#allocation8 + $0x30] sm:$0xff]
    %v276 = vld [vmem:[#allocation8 + $0x38] sm:$0xff]
    %v277 = vld [vmem:[#allocation8 + $0x40] sm:$0xff]
    %v278 = vld [vmem:[#allocation8 + $0x48] sm:$0xff]
    %v279 = vld [vmem:[#allocation8 + $0x50] sm:$0xff]
    %v280 = vld [vmem:[#allocation8 + $0x58] sm:$0xff]
    %v281 = vld [vmem:[#allocation8 + $0x60] sm:$0xff]
    %v282 = vld [vmem:[#allocation8 + $0x68] sm:$0xff]
    %v283 = vld [vmem:[#allocation8 + $0x70] sm:$0xff]
    %v284 = vld [vmem:[#allocation8 + $0x78] sm:$0xff]
    %v285 = vld [vmem:[%s6] sm:$0x1]
    %v287 = vlaneseq
    %v288 = vshrl.u32 %v287, 7
    %v289 = vsub.s32 0, %v288
    %v290 = vrot.slane %v285, %v289
    %292 = vmatprep.subr.mxu0 0.0
    %293 = vmatpush1.msra.mxu0 %v269
    %294 = vmatprep.subr.mxu0 0.0
    %295 = vmatpush1.msra.mxu0 %v270
    %296 = vmatprep.subr.mxu0 0.0
    %297 = vmatpush1.msra.mxu0 %v271
    %298 = vmatprep.subr.mxu0 0.0
    %299 = vmatpush1.msra.mxu0 %v272
    %300 = vmatprep.subr.mxu0 0.0
    %301 = vmatpush1.msra.mxu0 %v273
    %302 = vmatprep.subr.mxu0 0.0
    %303 = vmatpush1.msra.mxu0 %v274
    %304 = vmatprep.subr.mxu0 0.0
    %305 = vmatpush1.msra.mxu0 %v275
    %306 = vmatprep.subr.mxu0 0.0
    %307 = vmatpush1.msra.mxu0 %v276
    %308 = vmatprep.subr.mxu0 0.0
    %309 = vmatpush1.msra.mxu0 %v277
    %310 = vmatprep.subr.mxu0 0.0
    %311 = vmatpush1.msra.mxu0 %v278
    %312 = vmatprep.subr.mxu0 0.0
    %313 = vmatpush1.msra.mxu0 %v279
    %314 = vmatprep.subr.mxu0 0.0
    %315 = vmatpush1.msra.mxu0 %v280
    %316 = vmatprep.subr.mxu0 0.0
    %317 = vmatpush1.msra.mxu0 %v281
    %318 = vmatprep.subr.mxu0 0.0
    %319 = vmatpush1.msra.mxu0 %v282
    %320 = vmatprep.subr.mxu0 0.0
    %321 = vmatpush1.msra.mxu0 %v283
    %322 = vmatprep.subr.mxu0 0.0
    %323 = vmatpush1.msra.mxu0 %v284
    %324 = vmatprep.subr.mxu0 0.0
    %325 = vmatpush1.msra.mxu0 0.0
    %326 = vmatprep.subr.mxu0 0.0
    %327 = vmatpush1.msra.mxu0 0.0
    %328 = vmatprep.subr.mxu0 0.0
    %329 = vmatpush1.msra.mxu0 0.0
    %330 = vmatprep.subr.mxu0 0.0
    %331 = vmatpush1.msra.mxu0 0.0
    %332 = vmatprep.subr.mxu0 0.0
    %333 = vmatpush1.msra.mxu0 0.0
    %334 = vmatprep.subr.mxu0 0.0
    %335 = vmatpush1.msra.mxu0 0.0
    %336 = vmatprep.subr.mxu0 0.0
    %337 = vmatpush1.msra.mxu0 0.0
    %338 = vmatprep.subr.mxu0 0.0
    %339 = vmatpush1.msra.mxu0 0.0
    %340 = vmatprep.subr.mxu0 0.0
    %341 = vmatpush1.msra.mxu0 0.0
    %342 = vmatprep.subr.mxu0 0.0
    %343 = vmatpush1.msra.mxu0 0.0
    %344 = vmatprep.subr.mxu0 0.0
    %345 = vmatpush1.msra.mxu0 0.0
    %346 = vmatprep.subr.mxu0 0.0
    %347 = vmatpush1.msra.mxu0 0.0
    %348 = vmatprep.subr.mxu0 0.0
    %349 = vmatpush1.msra.mxu0 0.0
    %350 = vmatprep.subr.mxu0 0.0
    %351 = vmatpush1.msra.mxu0 0.0
    %352 = vmatprep.subr.mxu0 0.0
    %353 = vmatpush1.msra.mxu0 0.0
    %354 = vmatprep.subr.mxu0 0.0
    %355 = vmatpush1.msra.mxu0 0.0
    %356 = vmatprep.mubr.f32.mxu0 0.0
    %357 = vmatmul.mubr.f32.gmra.mrb[0].mxu0 %v268
    %v358 = vpop.f32.mrb[0].mxu0
    %v359 = vadd.f32 %v290, %v358
    %v360 = vpop.f32.mrb[0].mxu0
    %361 = vdwg.mxu0
    %362 = vst [vmem:[#allocation10] sm:$0xff] %v359
    // Predicated region
    $region46: #{tpu_custom_call.1} parent=1 // pred_check
      _
    $region47: #{tpu_custom_call.1} parent=1 // pred_check_branch
      %364 = sbr.rel (0) target = $region49
    $region48: #{tpu_custom_call.1} parent=1 // pred_region
      %s366 = ssub.s32 128, 128
      %367 = vsyncadd [#allocation4], %s366
      %s369 = sshll.u32 [#allocation10], 4
      %s370 = int_to_ptr.vmem [resolvable:$true] %s369
      %372 = dma.vmem_to_hbm [thread:$0]  %s370, 128, %s7, [#allocation4]
    $region49: #{tpu_custom_call.1} parent=1 // pred_fallthru
      _
    // Predicated region
    $region50: #{tpu_custom_call.1} parent=1 // pred_check
      _
    $region51: #{tpu_custom_call.1} parent=1 // pred_check_branch
      %374 = sbr.rel (0) target = $region53
    $region52: #{tpu_custom_call.1} parent=1 // pred_region
      %375 = dma.done [#allocation4], 128
    $region53: #{tpu_custom_call.1} parent=1 // pred_fallthru
      _
    %376 = vsyncpa [#allocation3], 1
    %377 = vsyncpa [#allocation6], 1
    %378 = vsyncpa [#allocation9], 1
    %379 = vsyncpa [#allocation4], 1

// kernel: tpu_custom_call.1
$region0: #{tpu_custom_call.1}
  #allocation0 [shape = 'u32[]', space=smem, size = 0x4, offset = 0x4, fixed_abs, tag = 'smem constant byte address 0x4 - core index']
  #allocation1 [shape = 'u32[144,128]{1,0:T(1,128)}', space=vmem, size = 0x12000, scoped, tag = 'internal scratch']
  %s0 = inlined_call_operand.hbm [shape: f32[8,128], index: 0, kind: input, shape index: {}]
  %s1 = inlined_call_operand.hbm [shape: f32[128,128], index: 1, kind: input, shape index: {}]
  %s2 = inlined_call_operand.vmem [shape: f32[1,128], index: 2, kind: input, shape index: {}]
  %s3 = inlined_call_operand.hbm [shape: f32[128,128], index: 3, kind: input, shape index: {}]
  %s4 = inlined_call_operand.vmem [shape: f32[1,128], index: 4, kind: input, shape index: {}]
  %s5 = inlined_call_operand.hbm [shape: f32[128,128], index: 5, kind: input, shape index: {}]
  %s6 = inlined_call_operand.vmem [shape: f32[1,128], index: 6, kind: input, shape index: {}]
  %s7 = inlined_call_operand.hbm [shape: f32[8,128], index: 7, kind: output, shape index: {}]
  %s8 = sld [smem:[#allocation0]]
  $region54: #{tpu_custom_call.1} parent=0
    _
  %s10 = ssub.s32 1, %s8
  %s11 = scalar_select 0, %s10, %s8
  $region1: #{tpu_custom_call.1} parent=0
    #allocation2 [shape = 'u8[4096]{0}', space=vmem, size = 0x1000, scoped, tag = 'input window, operand 0, single buffered']
    #allocation3 [shape = 's32[1]{0}', space=sflag, size = 0x4, scoped, tag = 'scoped memory for tpu_custom_call.1']
    #allocation4 [shape = 's32[1]{0}', space=sflag, size = 0x4, scoped, tag = 'scoped memory for tpu_custom_call.1']
    #allocation5 [shape = 'u8[65536]{0}', space=vmem, size = 0x10000, scoped, tag = 'input window, operand 1, single buffered']
    #allocation6 [shape = 's32[1]{0}', space=sflag, size = 0x4, scoped, tag = 'scoped memory for tpu_custom_call.1']
    #allocation7 [shape = 'u8[65536]{0}', space=vmem, size = 0x10000, scoped, tag = 'input window, operand 3, single buffered']
    #allocation8 [shape = 'u8[65536]{0}', space=vmem, size = 0x10000, scoped, tag = 'input window, operand 5, single buffered']
    #allocation9 [shape = 's32[1]{0}', space=sflag, size = 0x4, scoped, tag = 'scoped memory for tpu_custom_call.1']
    #allocation10 [shape = 'u8[4096]{0}', space=vmem, size = 0x1000, scoped, tag = 'output window, operand 0, single buffered']
    %12 = vsyncpa [#allocation3], 0
    %13 = vsyncpa [#allocation6], 0
    %14 = vsyncpa [#allocation9], 0
    %15 = vsyncpa [#allocation4], 0
    // Predicated region
    $region2: #{tpu_custom_call.1} parent=1 // pred_check
      _
    $region3: #{tpu_custom_call.1} parent=1 // pred_check_branch
      %17 = sbr.rel (0) target = $region5
    $region4: #{tpu_custom_call.1} parent=1 // pred_region
      %s19 = ssub.s32 128, 128
      %20 = vsyncadd [#allocation3], %s19
      %s22 = sshll.u32 [#allocation2], 4
      %s23 = int_to_ptr.vmem [resolvable:$true] %s22
      %25 = dma.hbm_to_vmem [thread:$0]  %s0, 128, %s23, [#allocation3]
    $region5: #{tpu_custom_call.1} parent=1 // pred_fallthru
      _
    // Predicated region
    $region6: #{tpu_custom_call.1} parent=1 // pred_check
      _
    $region7: #{tpu_custom_call.1} parent=1 // pred_check_branch
      %27 = sbr.rel (0) target = $region9
    $region8: #{tpu_custom_call.1} parent=1 // pred_region
      %s29 = ssub.s32 2048, 2048
      %30 = vsyncadd [#allocation6], %s29
      %s31 = sshll.u32 [#allocation5], 4
      %s32 = int_to_ptr.vmem [resolvable:$true] %s31
      %37 = dma.hbm_to_vmem [thread:$0]  %s1, 2048, %s32, [#allocation6], 128, 128, 8
    $region9: #{tpu_custom_call.1} parent=1 // pred_fallthru
      _
    // Predicated region
    $region10: #{tpu_custom_call.1} parent=1 // pred_check
      _
    $region11: #{tpu_custom_call.1} parent=1 // pred_check_branch
      %39 = sbr.rel (0) target = $region13
    $region12: #{tpu_custom_call.1} parent=1 // pred_region
      _
    $region13: #{tpu_custom_call.1} parent=1 // pred_fallthru
      _
    // Predicated region
    $region14: #{tpu_custom_call.1} parent=1 // pred_check
      _
    $region15: #{tpu_custom_call.1} parent=1 // pred_check_branch
      %41 = sbr.rel (0) target = $region17
    $region16: #{tpu_custom_call.1} parent=1 // pred_region
      %s43 = ssub.s32 2048, 2048
      %44 = vsyncadd [#allocation6], %s43
      %s45 = sshll.u32 [#allocation7], 4
      %s46 = int_to_ptr.vmem [resolvable:$true] %s45
      %51 = dma.hbm_to_vmem [thread:$0]  %s3, 2048, %s46, [#allocation6], 128, 128, 8
    $region17: #{tpu_custom_call.1} parent=1 // pred_fallthru
      _
    // Predicated region
    $region18: #{tpu_custom_call.1} parent=1 // pred_check
      _
    $region19: #{tpu_custom_call.1} parent=1 // pred_check_branch
      %53 = sbr.rel (0) target = $region21
    $region20: #{tpu_custom_call.1} parent=1 // pred_region
      _
    $region21: #{tpu_custom_call.1} parent=1 // pred_fallthru
      _
    // Predicated region
    $region22: #{tpu_custom_call.1} parent=1 // pred_check
      _
    $region23: #{tpu_custom_call.1} parent=1 // pred_check_branch
      %55 = sbr.rel (0) target = $region25
    $region24: #{tpu_custom_call.1} parent=1 // pred_region
      %s57 = ssub.s32 2048, 2048
      %58 = vsyncadd [#allocation9], %s57
      %s59 = sshll.u32 [#allocation8], 4
      %s60 = int_to_ptr.vmem [resolvable:$true] %s59
      %65 = dma.hbm_to_vmem [thread:$0]  %s5, 2048, %s60, [#allocation9], 128, 128, 8
    $region25: #{tpu_custom_call.1} parent=1 // pred_fallthru
      _
    // Predicated region
    $region26: #{tpu_custom_call.1} parent=1 // pred_check
      _
    $region27: #{tpu_custom_call.1} parent=1 // pred_check_branch
      %67 = sbr.rel (0) target = $region29
    $region28: #{tpu_custom_call.1} parent=1 // pred_region
      _
    $region29: #{tpu_custom_call.1} parent=1 // pred_fallthru
      _
    // Predicated region
    $region30: #{tpu_custom_call.1} parent=1 // pred_check
      _
    $region31: #{tpu_custom_call.1} parent=1 // pred_check_branch
      %69 = sbr.rel (0) target = $region33
    $region32: #{tpu_custom_call.1} parent=1 // pred_region
      %70 = dma.done [#allocation3], 128
    $region33: #{tpu_custom_call.1} parent=1 // pred_fallthru
      _
    // Predicated region
    $region34: #{tpu_custom_call.1} parent=1 // pred_check
      _
    $region35: #{tpu_custom_call.1} parent=1 // pred_check_branch
      %72 = sbr.rel (0) target = $region37
    $region36: #{tpu_custom_call.1} parent=1 // pred_region
      %73 = dma.done [#allocation6], 2048
    $region37: #{tpu_custom_call.1} parent=1 // pred_fallthru
      _
    // Predicated region
    $region38: #{tpu_custom_call.1} parent=1 // pred_check
      _
    $region39: #{tpu_custom_call.1} parent=1 // pred_check_branch
      %75 = sbr.rel (0) target = $region41
    $region40: #{tpu_custom_call.1} parent=1 // pred_region
      %76 = dma.done [#allocation6], 2048
    $region41: #{tpu_custom_call.1} parent=1 // pred_fallthru
      _
    // Predicated region
    $region42: #{tpu_custom_call.1} parent=1 // pred_check
      _
    $region43: #{tpu_custom_call.1} parent=1 // pred_check_branch
      %78 = sbr.rel (0) target = $region45
    $region44: #{tpu_custom_call.1} parent=1 // pred_region
      %79 = dma.done [#allocation9], 2048
    $region45: #{tpu_custom_call.1} parent=1 // pred_fallthru
      _
    %v80 = vld [vmem:[#allocation2] sm:$0xff]
    %v81 = vld [vmem:[#allocation5] sm:$0xff]
    %v82 = vld [vmem:[#allocation5 + $0x8] sm:$0xff]
    %v83 = vld [vmem:[#allocation5 + $0x10] sm:$0xff]
    %v84 = vld [vmem:[#allocation5 + $0x18] sm:$0xff]
    %v85 = vld [vmem:[#allocation5 + $0x20] sm:$0xff]
    %v86 = vld [vmem:[#allocation5 + $0x28] sm:$0xff]
    %v87 = vld [vmem:[#allocation5 + $0x30] sm:$0xff]
    %v88 = vld [vmem:[#allocation5 + $0x38] sm:$0xff]
    %v89 = vld [vmem:[#allocation5 + $0x40] sm:$0xff]
    %v90 = vld [vmem:[#allocation5 + $0x48] sm:$0xff]
    %v91 = vld [vmem:[#allocation5 + $0x50] sm:$0xff]
    %v92 = vld [vmem:[#allocation5 + $0x58] sm:$0xff]
    %v93 = vld [vmem:[#allocation5 + $0x60] sm:$0xff]
    %v94 = vld [vmem:[#allocation5 + $0x68] sm:$0xff]
    %v95 = vld [vmem:[#allocation5 + $0x70] sm:$0xff]
    %v96 = vld [vmem:[#allocation5 + $0x78] sm:$0xff]
    %v97 = vld [vmem:[%s2] sm:$0x1]
    %v99 = vlaneseq
    %v100 = vshrl.u32 %v99, 7
    %v101 = vsub.s32 0, %v100
    %v102 = vrot.slane %v97, %v101
    %104 = vmatprep.subr.mxu0 0.0
    %105 = vmatpush1.msra.mxu0 %v81
    %106 = vmatprep.subr.mxu0 0.0
    %107 = vmatpush1.msra.mxu0 %v82
    %108 = vmatprep.subr.mxu0 0.0
    %109 = vmatpush1.msra.mxu0 %v83
    %110 = vmatprep.subr.mxu0 0.0
    %111 = vmatpush1.msra.mxu0 %v84
    %112 = vmatprep.subr.mxu0 0.0
    %113 = vmatpush1.msra.mxu0 %v85
    %114 = vmatprep.subr.mxu0 0.0
    %115 = vmatpush1.msra.mxu0 %v86
    %116 = vmatprep.subr.mxu0 0.0
    %117 = vmatpush1.msra.mxu0 %v87
    %118 = vmatprep.subr.mxu0 0.0
    %119 = vmatpush1.msra.mxu0 %v88
    %120 = vmatprep.subr.mxu0 0.0
    %121 = vmatpush1.msra.mxu0 %v89
    %122 = vmatprep.subr.mxu0 0.0
    %123 = vmatpush1.msra.mxu0 %v90
    %124 = vmatprep.subr.mxu0 0.0
    %125 = vmatpush1.msra.mxu0 %v91
    %126 = vmatprep.subr.mxu0 0.0
    %127 = vmatpush1.msra.mxu0 %v92
    %128 = vmatprep.subr.mxu0 0.0
    %129 = vmatpush1.msra.mxu0 %v93
    %130 = vmatprep.subr.mxu0 0.0
    %131 = vmatpush1.msra.mxu0 %v94
    %132 = vmatprep.subr.mxu0 0.0
    %133 = vmatpush1.msra.mxu0 %v95
    %134 = vmatprep.subr.mxu0 0.0
    %135 = vmatpush1.msra.mxu0 %v96
    %136 = vmatprep.subr.mxu0 0.0
    %137 = vmatpush1.msra.mxu0 0.0
    %138 = vmatprep.subr.mxu0 0.0
    %139 = vmatpush1.msra.mxu0 0.0
    %140 = vmatprep.subr.mxu0 0.0
    %141 = vmatpush1.msra.mxu0 0.0
    %142 = vmatprep.subr.mxu0 0.0
    %143 = vmatpush1.msra.mxu0 0.0
    %144 = vmatprep.subr.mxu0 0.0
    %145 = vmatpush1.msra.mxu0 0.0
    %146 = vmatprep.subr.mxu0 0.0
    %147 = vmatpush1.msra.mxu0 0.0
    %148 = vmatprep.subr.mxu0 0.0
    %149 = vmatpush1.msra.mxu0 0.0
    %150 = vmatprep.subr.mxu0 0.0
    %151 = vmatpush1.msra.mxu0 0.0
    %152 = vmatprep.subr.mxu0 0.0
    %153 = vmatpush1.msra.mxu0 0.0
    %154 = vmatprep.subr.mxu0 0.0
    %155 = vmatpush1.msra.mxu0 0.0
    %156 = vmatprep.subr.mxu0 0.0
    %157 = vmatpush1.msra.mxu0 0.0
    %158 = vmatprep.subr.mxu0 0.0
    %159 = vmatpush1.msra.mxu0 0.0
    %160 = vmatprep.subr.mxu0 0.0
    %161 = vmatpush1.msra.mxu0 0.0
    %162 = vmatprep.subr.mxu0 0.0
    %163 = vmatpush1.msra.mxu0 0.0
    %164 = vmatprep.subr.mxu0 0.0
    %165 = vmatpush1.msra.mxu0 0.0
    %166 = vmatprep.subr.mxu0 0.0
    %167 = vmatpush1.msra.mxu0 0.0
    %168 = vmatprep.mubr.f32.mxu0 0.0
    %169 = vmatmul.mubr.f32.gmra.mrb[0].mxu0 %v80
    %v170 = vpop.f32.mrb[0].mxu0
    %v171 = vadd.f32 %v102, %v170
    %v172 = vpop.f32.mrb[0].mxu0
    %173 = vdwg.mxu0
    %v174 = vmax.f32 %v171, 0.0
    %v175 = vld [vmem:[#allocation7] sm:$0xff]
    %v176 = vld [vmem:[#allocation7 + $0x8] sm:$0xff]
    %v177 = vld [vmem:[#allocation7 + $0x10] sm:$0xff]
    %v178 = vld [vmem:[#allocation7 + $0x18] sm:$0xff]
    %v179 = vld [vmem:[#allocation7 + $0x20] sm:$0xff]
    %v180 = vld [vmem:[#allocation7 + $0x28] sm:$0xff]
    %v181 = vld [vmem:[#allocation7 + $0x30] sm:$0xff]
    %v182 = vld [vmem:[#allocation7 + $0x38] sm:$0xff]
    %v183 = vld [vmem:[#allocation7 + $0x40] sm:$0xff]
    %v184 = vld [vmem:[#allocation7 + $0x48] sm:$0xff]
    %v185 = vld [vmem:[#allocation7 + $0x50] sm:$0xff]
    %v186 = vld [vmem:[#allocation7 + $0x58] sm:$0xff]
    %v187 = vld [vmem:[#allocation7 + $0x60] sm:$0xff]
    %v188 = vld [vmem:[#allocation7 + $0x68] sm:$0xff]
    %v189 = vld [vmem:[#allocation7 + $0x70] sm:$0xff]
    %v190 = vld [vmem:[#allocation7 + $0x78] sm:$0xff]
    %v191 = vld [vmem:[%s4] sm:$0x1]
    %v193 = vlaneseq
    %v194 = vshrl.u32 %v193, 7
    %v195 = vsub.s32 0, %v194
    %v196 = vrot.slane %v191, %v195
    %198 = vmatprep.subr.mxu0 0.0
    %199 = vmatpush1.msra.mxu0 %v175
    %200 = vmatprep.subr.mxu0 0.0
    %201 = vmatpush1.msra.mxu0 %v176
    %202 = vmatprep.subr.mxu0 0.0
    %203 = vmatpush1.msra.mxu0 %v177
    %204 = vmatprep.subr.mxu0 0.0
    %205 = vmatpush1.msra.mxu0 %v178
    %206 = vmatprep.subr.mxu0 0.0
    %207 = vmatpush1.msra.mxu0 %v179
    %208 = vmatprep.subr.mxu0 0.0
    %209 = vmatpush1.msra.mxu0 %v180
    %210 = vmatprep.subr.mxu0 0.0
    %211 = vmatpush1.msra.mxu0 %v181
    %212 = vmatprep.subr.mxu0 0.0
    %213 = vmatpush1.msra.mxu0 %v182
    %214 = vmatprep.subr.mxu0 0.0
    %215 = vmatpush1.msra.mxu0 %v183
    %216 = vmatprep.subr.mxu0 0.0
    %217 = vmatpush1.msra.mxu0 %v184
    %218 = vmatprep.subr.mxu0 0.0
    %219 = vmatpush1.msra.mxu0 %v185
    %220 = vmatprep.subr.mxu0 0.0
    %221 = vmatpush1.msra.mxu0 %v186
    %222 = vmatprep.subr.mxu0 0.0
    %223 = vmatpush1.msra.mxu0 %v187
    %224 = vmatprep.subr.mxu0 0.0
    %225 = vmatpush1.msra.mxu0 %v188
    %226 = vmatprep.subr.mxu0 0.0
    %227 = vmatpush1.msra.mxu0 %v189
    %228 = vmatprep.subr.mxu0 0.0
    %229 = vmatpush1.msra.mxu0 %v190
    %230 = vmatprep.subr.mxu0 0.0
    %231 = vmatpush1.msra.mxu0 0.0
    %232 = vmatprep.subr.mxu0 0.0
    %233 = vmatpush1.msra.mxu0 0.0
    %234 = vmatprep.subr.mxu0 0.0
    %235 = vmatpush1.msra.mxu0 0.0
    %236 = vmatprep.subr.mxu0 0.0
    %237 = vmatpush1.msra.mxu0 0.0
    %238 = vmatprep.subr.mxu0 0.0
    %239 = vmatpush1.msra.mxu0 0.0
    %240 = vmatprep.subr.mxu0 0.0
    %241 = vmatpush1.msra.mxu0 0.0
    %242 = vmatprep.subr.mxu0 0.0
    %243 = vmatpush1.msra.mxu0 0.0
    %244 = vmatprep.subr.mxu0 0.0
    %245 = vmatpush1.msra.mxu0 0.0
    %246 = vmatprep.subr.mxu0 0.0
    %247 = vmatpush1.msra.mxu0 0.0
    %248 = vmatprep.subr.mxu0 0.0
    %249 = vmatpush1.msra.mxu0 0.0
    %250 = vmatprep.subr.mxu0 0.0
    %251 = vmatpush1.msra.mxu0 0.0
    %252 = vmatprep.subr.mxu0 0.0
    %253 = vmatpush1.msra.mxu0 0.0
    %254 = vmatprep.subr.mxu0 0.0
    %255 = vmatpush1.msra.mxu0 0.0
    %256 = vmatprep.subr.mxu0 0.0
    %257 = vmatpush1.msra.mxu0 0.0
    %258 = vmatprep.subr.mxu0 0.0
    %259 = vmatpush1.msra.mxu0 0.0
    %260 = vmatprep.subr.mxu0 0.0
    %261 = vmatpush1.msra.mxu0 0.0
    %262 = vmatprep.mubr.f32.mxu0 0.0
    %263 = vmatmul.mubr.f32.gmra.mrb[0].mxu0 %v174
    %v264 = vpop.f32.mrb[0].mxu0
    %v265 = vadd.f32 %v196, %v264
    %v266 = vpop.f32.mrb[0].mxu0
    %267 = vdwg.mxu0
    %v268 = vmax.f32 %v265, 0.0
    %v269 = vld [vmem:[#allocation8] sm:$0xff]
    %v270 = vld [vmem:[#allocation8 + $0x8] sm:$0xff]
    %v271 = vld [vmem:[#allocation8 + $0x10] sm:$0xff]
    %v272 = vld [vmem:[#allocation8 + $0x18] sm:$0xff]
    %v273 = vld [vmem:[#allocation8 + $0x20] sm:$0xff]
    %v274 = vld [vmem:[#allocation8 + $0x28] sm:$0xff]
    %v275 = vld [vmem:[#allocation8 + $0x30] sm:$0xff]
    %v276 = vld [vmem:[#allocation8 + $0x38] sm:$0xff]
    %v277 = vld [vmem:[#allocation8 + $0x40] sm:$0xff]
    %v278 = vld [vmem:[#allocation8 + $0x48] sm:$0xff]
    %v279 = vld [vmem:[#allocation8 + $0x50] sm:$0xff]
    %v280 = vld [vmem:[#allocation8 + $0x58] sm:$0xff]
    %v281 = vld [vmem:[#allocation8 + $0x60] sm:$0xff]
    %v282 = vld [vmem:[#allocation8 + $0x68] sm:$0xff]
    %v283 = vld [vmem:[#allocation8 + $0x70] sm:$0xff]
    %v284 = vld [vmem:[#allocation8 + $0x78] sm:$0xff]
    %v285 = vld [vmem:[%s6] sm:$0x1]
    %v287 = vlaneseq
    %v288 = vshrl.u32 %v287, 7
    %v289 = vsub.s32 0, %v288
    %v290 = vrot.slane %v285, %v289
    %292 = vmatprep.subr.mxu0 0.0
    %293 = vmatpush1.msra.mxu0 %v269
    %294 = vmatprep.subr.mxu0 0.0
    %295 = vmatpush1.msra.mxu0 %v270
    %296 = vmatprep.subr.mxu0 0.0
    %297 = vmatpush1.msra.mxu0 %v271
    %298 = vmatprep.subr.mxu0 0.0
    %299 = vmatpush1.msra.mxu0 %v272
    %300 = vmatprep.subr.mxu0 0.0
    %301 = vmatpush1.msra.mxu0 %v273
    %302 = vmatprep.subr.mxu0 0.0
    %303 = vmatpush1.msra.mxu0 %v274
    %304 = vmatprep.subr.mxu0 0.0
    %305 = vmatpush1.msra.mxu0 %v275
    %306 = vmatprep.subr.mxu0 0.0
    %307 = vmatpush1.msra.mxu0 %v276
    %308 = vmatprep.subr.mxu0 0.0
    %309 = vmatpush1.msra.mxu0 %v277
    %310 = vmatprep.subr.mxu0 0.0
    %311 = vmatpush1.msra.mxu0 %v278
    %312 = vmatprep.subr.mxu0 0.0
    %313 = vmatpush1.msra.mxu0 %v279
    %314 = vmatprep.subr.mxu0 0.0
    %315 = vmatpush1.msra.mxu0 %v280
    %316 = vmatprep.subr.mxu0 0.0
    %317 = vmatpush1.msra.mxu0 %v281
    %318 = vmatprep.subr.mxu0 0.0
    %319 = vmatpush1.msra.mxu0 %v282
    %320 = vmatprep.subr.mxu0 0.0
    %321 = vmatpush1.msra.mxu0 %v283
    %322 = vmatprep.subr.mxu0 0.0
    %323 = vmatpush1.msra.mxu0 %v284
    %324 = vmatprep.subr.mxu0 0.0
    %325 = vmatpush1.msra.mxu0 0.0
    %326 = vmatprep.subr.mxu0 0.0
    %327 = vmatpush1.msra.mxu0 0.0
    %328 = vmatprep.subr.mxu0 0.0
    %329 = vmatpush1.msra.mxu0 0.0
    %330 = vmatprep.subr.mxu0 0.0
    %331 = vmatpush1.msra.mxu0 0.0
    %332 = vmatprep.subr.mxu0 0.0
    %333 = vmatpush1.msra.mxu0 0.0
    %334 = vmatprep.subr.mxu0 0.0
    %335 = vmatpush1.msra.mxu0 0.0
    %336 = vmatprep.subr.mxu0 0.0
    %337 = vmatpush1.msra.mxu0 0.0
    %338 = vmatprep.subr.mxu0 0.0
    %339 = vmatpush1.msra.mxu0 0.0
    %340 = vmatprep.subr.mxu0 0.0
    %341 = vmatpush1.msra.mxu0 0.0
    %342 = vmatprep.subr.mxu0 0.0
    %343 = vmatpush1.msra.mxu0 0.0
    %344 = vmatprep.subr.mxu0 0.0
    %345 = vmatpush1.msra.mxu0 0.0
    %346 = vmatprep.subr.mxu0 0.0
    %347 = vmatpush1.msra.mxu0 0.0
    %348 = vmatprep.subr.mxu0 0.0
    %349 = vmatpush1.msra.mxu0 0.0
    %350 = vmatprep.subr.mxu0 0.0
    %351 = vmatpush1.msra.mxu0 0.0
    %352 = vmatprep.subr.mxu0 0.0
    %353 = vmatpush1.msra.mxu0 0.0
    %354 = vmatprep.subr.mxu0 0.0
    %355 = vmatpush1.msra.mxu0 0.0
    %356 = vmatprep.mubr.f32.mxu0 0.0
    %357 = vmatmul.mubr.f32.gmra.mrb[0].mxu0 %v268
    %v358 = vpop.f32.mrb[0].mxu0
    %v359 = vadd.f32 %v290, %v358
    %v360 = vpop.f32.mrb[0].mxu0
    %361 = vdwg.mxu0
    %362 = vst [vmem:[#allocation10] sm:$0xff] %v359
    // Predicated region
    $region46: #{tpu_custom_call.1} parent=1 // pred_check
      _
    $region47: #{tpu_custom_call.1} parent=1 // pred_check_branch
      %364 = sbr.rel (0) target = $region49
    $region48: #{tpu_custom_call.1} parent=1 // pred_region
      %s366 = ssub.s32 128, 128
      %367 = vsyncadd [#allocation4], %s366
      %s369 = sshll.u32 [#allocation10], 4
      %s370 = int_to_ptr.vmem [resolvable:$true] %s369
      %372 = dma.vmem_to_hbm [thread:$0]  %s370, 128, %s7, [#allocation4]
    $region49: #{tpu_custom_call.1} parent=1 // pred_fallthru
      _
    // Predicated region
    $region50: #{tpu_custom_call.1} parent=1 // pred_check
      _
    $region51: #{tpu_custom_call.1} parent=1 // pred_check_branch
      %374 = sbr.rel (0) target = $region53
    $region52: #{tpu_custom_call.1} parent=1 // pred_region
      %375 = dma.done [#allocation4], 128
    $region53: #{tpu_custom_call.1} parent=1 // pred_fallthru
      _
    %376 = vsyncpa [#allocation3], 1
    %377 = vsyncpa [#allocation6], 1
    %378 = vsyncpa [#allocation9], 1
    %379 = vsyncpa [#allocation4], 1

// kernel: tpu_custom_call.1
$region0: #{tpu_custom_call.1}
  #allocation0 [shape = 'u32[]', space=smem, size = 0x4, offset = 0x4, fixed_abs, tag = 'smem constant byte address 0x4 - core index']
  #allocation1 [shape = 'u32[144,128]{1,0:T(1,128)}', space=vmem, size = 0x12000, scoped, tag = 'internal scratch']
  #allocation2 [shape = 'f32[8,128]{1,0:T(8,128)}', space=vmem, size = 0x1000, scoped, tag = 'scratch operand']
  %s0 = inlined_call_operand.hbm [shape: f32[8,128], index: 0, kind: input, shape index: {}]
  %s1 = inlined_call_operand.hbm [shape: f32[128,128], index: 1, kind: input, shape index: {}]
  %s2 = inlined_call_operand.vmem [shape: f32[1,128], index: 2, kind: input, shape index: {}]
  %s3 = inlined_call_operand.hbm [shape: f32[8,128], index: 3, kind: output, shape index: {}]
  %s4 = sld [smem:[#allocation0]]
  $region38: #{tpu_custom_call.1} parent=0
    _
  %s6 = ssub.s32 1, %s4
  %s7 = scalar_select 0, %s6, %s4
  $region1: #{tpu_custom_call.1} parent=0
    #allocation3 [shape = 'u8[4096]{0}', space=vmem, size = 0x1000, scoped, tag = 'input window, operand 0, single buffered']
    #allocation4 [shape = 's32[1]{0}', space=sflag, size = 0x4, scoped, tag = 'scoped memory for tpu_custom_call.1']
    #allocation5 [shape = 's32[1]{0}', space=sflag, size = 0x4, scoped, tag = 'scoped memory for tpu_custom_call.1']
    #allocation6 [shape = 'u8[65536]{0}', space=vmem, size = 0x10000, scoped, tag = 'input window, operand 1, single buffered']
    #allocation7 [shape = 's32[1]{0}', space=sflag, size = 0x4, scoped, tag = 'scoped memory for tpu_custom_call.1']
    #allocation8 [shape = 'u8[4096]{0}', space=vmem, size = 0x1000, scoped, tag = 'output window, operand 0, single buffered']
    %8 = vsyncpa [#allocation4], 0
    %9 = vsyncpa [#allocation7], 0
    %10 = vsyncpa [#allocation5], 0
    // Predicated region
    $region2: #{tpu_custom_call.1} parent=1 // pred_check
      _
    $region3: #{tpu_custom_call.1} parent=1 // pred_check_branch
      %12 = sbr.rel (0) target = $region5
    $region4: #{tpu_custom_call.1} parent=1 // pred_region
      %s14 = ssub.s32 128, 128
      %15 = vsyncadd [#allocation4], %s14
      %s17 = sshll.u32 [#allocation3], 4
      %s18 = int_to_ptr.vmem [resolvable:$true] %s17
      %20 = dma.hbm_to_vmem [thread:$0]  %s0, 128, %s18, [#allocation4]
    $region5: #{tpu_custom_call.1} parent=1 // pred_fallthru
      _
    // Predicated region
    $region6: #{tpu_custom_call.1} parent=1 // pred_check
      _
    $region7: #{tpu_custom_call.1} parent=1 // pred_check_branch
      %22 = sbr.rel (0) target = $region9
    $region8: #{tpu_custom_call.1} parent=1 // pred_region
      %s24 = ssub.s32 2048, 2048
      %25 = vsyncadd [#allocation7], %s24
      %s26 = sshll.u32 [#allocation6], 4
      %s27 = int_to_ptr.vmem [resolvable:$true] %s26
      %32 = dma.hbm_to_vmem [thread:$0]  %s1, 2048, %s27, [#allocation7], 128, 128, 8
    $region9: #{tpu_custom_call.1} parent=1 // pred_fallthru
      _
    // Predicated region
    $region10: #{tpu_custom_call.1} parent=1 // pred_check
      _
    $region11: #{tpu_custom_call.1} parent=1 // pred_check_branch
      %34 = sbr.rel (0) target = $region13
    $region12: #{tpu_custom_call.1} parent=1 // pred_region
      _
    $region13: #{tpu_custom_call.1} parent=1 // pred_fallthru
      _
    // Predicated region
    $region14: #{tpu_custom_call.1} parent=1 // pred_check
      _
    $region15: #{tpu_custom_call.1} parent=1 // pred_check_branch
      %36 = sbr.rel (0) target = $region17
    $region16: #{tpu_custom_call.1} parent=1 // pred_region
      %37 = dma.done [#allocation4], 128
    $region17: #{tpu_custom_call.1} parent=1 // pred_fallthru
      _
    // Predicated region
    $region18: #{tpu_custom_call.1} parent=1 // pred_check
      _
    $region19: #{tpu_custom_call.1} parent=1 // pred_check_branch
      %39 = sbr.rel (0) target = $region21
    $region20: #{tpu_custom_call.1} parent=1 // pred_region
      %40 = dma.done [#allocation7], 2048
    $region21: #{tpu_custom_call.1} parent=1 // pred_fallthru
      _
    %p41 = scmp.eq.s32.totalorder 0, 0
    // Predicated region
    $region22: #{tpu_custom_call.1} parent=1 // pred_check
      %p42 = pneg %p41
    $region23: #{tpu_custom_call.1} parent=1 // pred_check_branch
      %44 = sbr.rel (%p42) target = $region25
    $region24: #{tpu_custom_call.1} parent=1 // pred_region
      %45 = vst [vmem:[#allocation2] sm:$0xff] 0.0
    $region25: #{tpu_custom_call.1} parent=1 // pred_fallthru
      _
    %v46 = vld [vmem:[#allocation2] sm:$0xff]
    %v47 = vld [vmem:[#allocation3] sm:$0xff]
    %v48 = vld [vmem:[#allocation6] sm:$0xff]
    %v49 = vld [vmem:[#allocation6 + $0x8] sm:$0xff]
    %v50 = vld [vmem:[#allocation6 + $0x10] sm:$0xff]
    %v51 = vld [vmem:[#allocation6 + $0x18] sm:$0xff]
    %v52 = vld [vmem:[#allocation6 + $0x20] sm:$0xff]
    %v53 = vld [vmem:[#allocation6 + $0x28] sm:$0xff]
    %v54 = vld [vmem:[#allocation6 + $0x30] sm:$0xff]
    %v55 = vld [vmem:[#allocation6 + $0x38] sm:$0xff]
    %v56 = vld [vmem:[#allocation6 + $0x40] sm:$0xff]
    %v57 = vld [vmem:[#allocation6 + $0x48] sm:$0xff]
    %v58 = vld [vmem:[#allocation6 + $0x50] sm:$0xff]
    %v59 = vld [vmem:[#allocation6 + $0x58] sm:$0xff]
    %v60 = vld [vmem:[#allocation6 + $0x60] sm:$0xff]
    %v61 = vld [vmem:[#allocation6 + $0x68] sm:$0xff]
    %v62 = vld [vmem:[#allocation6 + $0x70] sm:$0xff]
    %v63 = vld [vmem:[#allocation6 + $0x78] sm:$0xff]
    %64 = vmatprep.subr.mxu0 0.0
    %65 = vmatpush1.msra.mxu0 %v48
    %66 = vmatprep.subr.mxu0 0.0
    %67 = vmatpush1.msra.mxu0 %v49
    %68 = vmatprep.subr.mxu0 0.0
    %69 = vmatpush1.msra.mxu0 %v50
    %70 = vmatprep.subr.mxu0 0.0
    %71 = vmatpush1.msra.mxu0 %v51
    %72 = vmatprep.subr.mxu0 0.0
    %73 = vmatpush1.msra.mxu0 %v52
    %74 = vmatprep.subr.mxu0 0.0
    %75 = vmatpush1.msra.mxu0 %v53
    %76 = vmatprep.subr.mxu0 0.0
    %77 = vmatpush1.msra.mxu0 %v54
    %78 = vmatprep.subr.mxu0 0.0
    %79 = vmatpush1.msra.mxu0 %v55
    %80 = vmatprep.subr.mxu0 0.0
    %81 = vmatpush1.msra.mxu0 %v56
    %82 = vmatprep.subr.mxu0 0.0
    %83 = vmatpush1.msra.mxu0 %v57
    %84 = vmatprep.subr.mxu0 0.0
    %85 = vmatpush1.msra.mxu0 %v58
    %86 = vmatprep.subr.mxu0 0.0
    %87 = vmatpush1.msra.mxu0 %v59
    %88 = vmatprep.subr.mxu0 0.0
    %89 = vmatpush1.msra.mxu0 %v60
    %90 = vmatprep.subr.mxu0 0.0
    %91 = vmatpush1.msra.mxu0 %v61
    %92 = vmatprep.subr.mxu0 0.0
    %93 = vmatpush1.msra.mxu0 %v62
    %94 = vmatprep.subr.mxu0 0.0
    %95 = vmatpush1.msra.mxu0 %v63
    %96 = vmatprep.subr.mxu0 0.0
    %97 = vmatpush1.msra.mxu0 0.0
    %98 = vmatprep.subr.mxu0 0.0
    %99 = vmatpush1.msra.mxu0 0.0
    %100 = vmatprep.subr.mxu0 0.0
    %101 = vmatpush1.msra.mxu0 0.0
    %102 = vmatprep.subr.mxu0 0.0
    %103 = vmatpush1.msra.mxu0 0.0
    %104 = vmatprep.subr.mxu0 0.0
    %105 = vmatpush1.msra.mxu0 0.0
    %106 = vmatprep.subr.mxu0 0.0
    %107 = vmatpush1.msra.mxu0 0.0
    %108 = vmatprep.subr.mxu0 0.0
    %109 = vmatpush1.msra.mxu0 0.0
    %110 = vmatprep.subr.mxu0 0.0
    %111 = vmatpush1.msra.mxu0 0.0
    %112 = vmatprep.subr.mxu0 0.0
    %113 = vmatpush1.msra.mxu0 0.0
    %114 = vmatprep.subr.mxu0 0.0
    %115 = vmatpush1.msra.mxu0 0.0
    %116 = vmatprep.subr.mxu0 0.0
    %117 = vmatpush1.msra.mxu0 0.0
    %118 = vmatprep.subr.mxu0 0.0
    %119 = vmatpush1.msra.mxu0 0.0
    %120 = vmatprep.subr.mxu0 0.0
    %121 = vmatpush1.msra.mxu0 0.0
    %122 = vmatprep.subr.mxu0 0.0
    %123 = vmatpush1.msra.mxu0 0.0
    %124 = vmatprep.subr.mxu0 0.0
    %125 = vmatpush1.msra.mxu0 0.0
    %126 = vmatprep.subr.mxu0 0.0
    %127 = vmatpush1.msra.mxu0 0.0
    %128 = vmatprep.mubr.f32.mxu0 0.0
    %129 = vmatmul.mubr.f32.gmra.mrb[0].mxu0 %v47
    %v130 = vpop.f32.mrb[0].mxu0
    %v131 = vadd.f32 0.0, %v130
    %v132 = vpop.f32.mrb[0].mxu0
    %133 = vdwg.mxu0
    %v134 = vadd.f32 %v46, %v131
    %135 = vst [vmem:[#allocation2] sm:$0xff] %v134
    // Predicated region
    $region26: #{tpu_custom_call.1} parent=1 // pred_check
      %p136 = pneg %p41
    $region27: #{tpu_custom_call.1} parent=1 // pred_check_branch
      %138 = sbr.rel (%p136) target = $region29
    $region28: #{tpu_custom_call.1} parent=1 // pred_region
      %v139 = vld [vmem:[#allocation2] sm:$0xff]
      %v140 = vld [vmem:[%s2] sm:$0x1]
      %v142 = vlaneseq
      %v143 = vshrl.u32 %v142, 7
      %v144 = vsub.s32 0, %v143
      %v145 = vrot.slane %v140, %v144
      %v147 = vadd.f32 %v139, %v145
      %v148 = vmax.f32 %v147, 0.0
      %149 = vst [vmem:[#allocation8] sm:$0xff] %v148
    $region29: #{tpu_custom_call.1} parent=1 // pred_fallthru
      _
    // Predicated region
    $region30: #{tpu_custom_call.1} parent=1 // pred_check
      _
    $region31: #{tpu_custom_call.1} parent=1 // pred_check_branch
      %151 = sbr.rel (0) target = $region33
    $region32: #{tpu_custom_call.1} parent=1 // pred_region
      %s153 = ssub.s32 128, 128
      %154 = vsyncadd [#allocation5], %s153
      %s156 = sshll.u32 [#allocation8], 4
      %s157 = int_to_ptr.vmem [resolvable:$true] %s156
      %159 = dma.vmem_to_hbm [thread:$0]  %s157, 128, %s3, [#allocation5]
    $region33: #{tpu_custom_call.1} parent=1 // pred_fallthru
      _
    // Predicated region
    $region34: #{tpu_custom_call.1} parent=1 // pred_check
      _
    $region35: #{tpu_custom_call.1} parent=1 // pred_check_branch
      %161 = sbr.rel (0) target = $region37
    $region36: #{tpu_custom_call.1} parent=1 // pred_region
      %162 = dma.done [#allocation5], 128
    $region37: #{tpu_custom_call.1} parent=1 // pred_fallthru
      _
    %163 = vsyncpa [#allocation4], 1
    %164 = vsyncpa [#allocation7], 1
    %165 = vsyncpa [#allocation5], 1

</llo_original>
